<compile_context>
chip_gen: v7x
topology: tpu7x:2x2x1
jax: 0.10.0
libtpu: 0.0.40
codegen_flags: <defaults>
</compile_context>

<pallas_src>
import jax
import jax.numpy as jnp
from jax.experimental import pallas as pl
from jax.experimental.pallas import tpu as pltpu

# Keep the wrapper-side table folding and the pure-JAX reference at full f32
# matmul precision so the kernel can be checked at tight tolerance.
jax.config.update("jax_default_matmul_precision", "highest")


def _code_embedding_kernel(idx_ref, table_ref, ba_ref, mask_ref,
                           code_ref, aw_ref):
    # idx_ref:   (3*B*L, 1) int32  -- [start | path+Vt | end+Vt+Vp] row ids
    # table_ref: (2*Vt+Vp, Dp) f32 -- W-projected tables, stacked row-wise
    # ba_ref:    (2, Dp) f32       -- [bias ; attention]
    # mask_ref:  (B, L) f32
    # code_ref:  (B, Dp) f32       -- code vectors (lane dense)
    # aw_ref:    (B, L) f32        -- attention weights
    B, L = mask_ref.shape
    BL = B * L
    Vtot, Dp = table_ref.shape

    # One fused row gather for all three context parts: exact one-hot @ table
    # on the (otherwise idle) MXU.
    # TODO(synk): for production vocabularies (> VMEM) replace with a
    # scalar-prefetch / make_async_copy DMA row gather keeping tables in HBM.
    iota = jax.lax.broadcasted_iota(jnp.int32, (3 * BL, Vtot), 1)
    onehot = (iota == idx_ref[...]).astype(jnp.float32)         # (3BL, Vtot)
    gathered = jnp.dot(onehot, table_ref[...],
                       preferred_element_type=jnp.float32)      # (3BL, Dp)

    bias = ba_ref[0:1, :]                                       # (1, Dp)
    attn = ba_ref[1:2, :]                                       # (1, Dp)

    # concat([s, p, e], -1) @ W + b  ==  s@W0 + p@W1 + e@W2 + b  (W pre-folded)
    pre = (gathered[0:BL] + gathered[BL:2 * BL] + gathered[2 * BL:3 * BL]
           + bias)
    combined = jnp.tanh(pre)                                    # (BL, Dp)
    comb3 = combined.reshape(B, L, Dp)                          # free sublane split

    # Attention logits with L on the lane axis, masked with a finite sentinel.
    logits = jnp.sum(comb3 * attn, axis=-1)                     # (B, L)
    logits = jnp.where(mask_ref[...] > 0.0, logits, jnp.float32(-1e30))

    # Lane-axis softmax over L.
    m = jnp.max(logits, axis=-1, keepdims=True)                 # (B, 1)
    e = jnp.exp(logits - m)                                     # (B, L)
    s = jnp.sum(e, axis=-1, keepdims=True)                      # (B, 1)
    weights = e / s                                             # (B, L)
    aw_ref[...] = weights

    # Weighted sum as a batched MXU contraction over L (no XLU transpose of
    # weights[:, :, None] * comb3).
    code = jnp.einsum("bql,bld->bqd", weights.reshape(B, 1, L), comb3,
                      preferred_element_type=jnp.float32)       # (B, 1, Dp)
    code_ref[...] = code.reshape(B, Dp)


def code_embedding_forward(start_tokens, paths, end_tokens, mask, params):
    """start/end_tokens, paths: (B, L) int; mask: (B, L) bool.
    Returns (code_vector (B, D) f32, attention_weights (B, L) f32)."""
    tok_emb = params["token_embedding"].astype(jnp.float32)     # (Vt, D)
    path_emb = params["path_embedding"].astype(jnp.float32)     # (Vp, D)
    w = params["linear_w"].astype(jnp.float32)                  # (3D, D)
    b = params["linear_b"].astype(jnp.float32)                  # (D,)
    attn = params["attention"].astype(jnp.float32)              # (D,)

    B, L = start_tokens.shape
    Vt, D = tok_emb.shape
    Vp = path_emb.shape[0]
    BL = B * L
    Dp = ((D + 127) // 128) * 128                               # lane-dense D

    # Fold the projection into the tables (param prep, once per weight set)
    # and stack into a single VMEM operand:
    #   rows [0, Vt)        -> start-token table @ W[:D]
    #   rows [Vt, Vt+Vp)    -> path table        @ W[D:2D]
    #   rows [Vt+Vp, 2Vt+Vp)-> end-token table   @ W[2D:]
    table = jnp.concatenate(
        [tok_emb @ w[0:D], path_emb @ w[D:2 * D], tok_emb @ w[2 * D:3 * D]],
        axis=0)                                                  # (2Vt+Vp, D)
    if Dp != D:
        table = jnp.pad(table, ((0, 0), (0, Dp - D)))
        b = jnp.pad(b, (0, Dp - D))
        attn = jnp.pad(attn, (0, Dp - D))
    bias_attn = jnp.stack([b, attn], axis=0)                    # (2, Dp)

    # Pack all three index streams (with stacked-table row offsets) into one
    # int32 operand -> one DMA instead of three.
    idx_packed = jnp.concatenate(
        [start_tokens.astype(jnp.int32).reshape(-1),
         paths.astype(jnp.int32).reshape(-1) + Vt,
         end_tokens.astype(jnp.int32).reshape(-1) + Vt + Vp]
    ).reshape(3 * BL, 1)

    mask_f = mask.astype(jnp.float32)                           # (B, L)

    # TODO(synk): nn.Dropout is identity in eval/inference mode and is omitted.
    vmem = pl.BlockSpec(memory_space=pltpu.MemorySpace.VMEM)
    code_vec, attn_w = pl.pallas_call(
        _code_embedding_kernel,
        out_shape=(
            jax.ShapeDtypeStruct((B, Dp), jnp.float32),
            jax.ShapeDtypeStruct((B, L), jnp.float32),
        ),
        in_specs=[vmem, vmem, vmem, vmem],
        out_specs=(vmem, vmem),
    )(idx_packed, table, bias_attn, mask_f)
    return code_vec[:, :D], attn_w


def _reference_forward(start_tokens, paths, end_tokens, mask, params):
    """Pure-JAX reference matching the PyTorch forward (eval mode)."""
    tok_emb, path_emb = params["token_embedding"], params["path_embedding"]
    w, b, attn = params["linear_w"], params["linear_b"], params["attention"]
    ctx = jnp.concatenate([jnp.take(tok_emb, start_tokens, axis=0),
                           jnp.take(path_emb, paths, axis=0),
                           jnp.take(tok_emb, end_tokens, axis=0)], axis=-1)
    combined = jnp.tanh(ctx @ w + b)        # dropout is identity in eval mode
    logits = combined @ attn
    logits = jnp.where(mask, logits, -jnp.inf)
    weights = jax.nn.softmax(logits, axis=-1)
    code_vec = jnp.sum(combined * weights[..., None], axis=1)
    return code_vec, weights


if __name__ == "__main__":
    key = jax.random.PRNGKey(0)
    B, L, D = 2, 8, 128                     # embedding_dim=128 (module default)
    TOKEN_VOCAB, PATH_VOCAB = 50, 40

    k = jax.random.split(key, 8)
    params = {
        "token_embedding": jax.random.normal(k[0], (TOKEN_VOCAB, D), jnp.float32),
        "path_embedding": jax.random.normal(k[1], (PATH_VOCAB, D), jnp.float32),
        # PyTorch Linear weight is (D, 3D); kernel uses the transposed (3D, D).
        "linear_w": jax.random.uniform(k[2], (3 * D, D), jnp.float32, -0.05, 0.05),
        "linear_b": jax.random.uniform(k[3], (D,), jnp.float32, -0.05, 0.05),
        "attention": jax.random.uniform(k[4], (D,), jnp.float32, -0.1, 0.1),
    }

    start_tokens = jax.random.randint(k[5], (B, L), 0, TOKEN_VOCAB, jnp.int32)
    paths = jax.random.randint(k[6], (B, L), 0, PATH_VOCAB, jnp.int32)
    end_tokens = jax.random.randint(k[7], (B, L), 0, TOKEN_VOCAB, jnp.int32)
    # mask: last two positions of batch 1 are padding
    mask = jnp.ones((B, L), dtype=bool).at[1, -2:].set(False)

    code_vec, attn_w = code_embedding_forward(
        start_tokens, paths, end_tokens, mask, params)
    code_vec = jax.block_until_ready(code_vec)
    attn_w = jax.block_until_ready(attn_w)

    ref_code, ref_attn = _reference_forward(
        start_tokens, paths, end_tokens, mask, params)

    assert code_vec.shape == (B, D) and attn_w.shape == (B, L)
    assert jnp.allclose(code_vec, ref_code, atol=1e-4, rtol=1e-4)
    assert jnp.allclose(attn_w, ref_attn, atol=1e-4, rtol=1e-4)

    print("KERNEL_OK")
</pallas_src>

<mosaic_0001>
module attributes {stable_mosaic.version = 11 : i64} {
  func.func @_code_embedding_kernel(%arg0: memref<48x1xi32, #tpu.memory_space<vmem>>, %arg1: memref<140x128xf32, #tpu.memory_space<vmem>>, %arg2: memref<2x128xf32, #tpu.memory_space<vmem>>, %arg3: memref<2x8xf32, #tpu.memory_space<vmem>>, %arg4: memref<2x128xf32, #tpu.memory_space<vmem>>, %arg5: memref<2x8xf32, #tpu.memory_space<vmem>>) attributes {dimension_semantics = [], scalar_prefetch = 0 : i64, scratch_operands = 0 : i64, tpu.core_type = #tpu.core_type<tc>} {
    %0 = tpu.iota {dimensions = array<i32: 1>} : vector<48x140xi32>
    %c0 = arith.constant 0 : index
    %c0_0 = arith.constant 0 : index
    %1 = vector.load %arg0[%c0, %c0_0] : memref<48x1xi32, #tpu.memory_space<vmem>>, vector<48x1xi32>
    %2 = vector.broadcast %1 : vector<48x1xi32> to vector<48x140xi32>
    %3 = arith.cmpi eq, %0, %2 : vector<48x140xi32>
    %4 = arith.extui %3 : vector<48x140xi1> to vector<48x140xi32>
    %5 = arith.sitofp %4 : vector<48x140xi32> to vector<48x140xf32>
    %c0_1 = arith.constant 0 : index
    %c0_2 = arith.constant 0 : index
    %6 = vector.load %arg1[%c0_1, %c0_2] : memref<140x128xf32, #tpu.memory_space<vmem>>, vector<140x128xf32>
    %cst = arith.constant dense<0.000000e+00> : vector<48x128xf32>
    %7 = tpu.matmul %5, %6, %cst {dimension_numbers = #tpu.dot_dimension_numbers<[1], [0], [0], [1], [0, 0, 1, 1], [], []>, precision = #tpu.contract_precision<fp32>} : vector<48x140xf32>, vector<140x128xf32>, vector<48x128xf32> -> vector<48x128xf32>
    %c0_3 = arith.constant 0 : index
    %c0_4 = arith.constant 0 : index
    %8 = vector.load %arg2[%c0_3, %c0_4] : memref<2x128xf32, #tpu.memory_space<vmem>>, vector<1x128xf32>
    %c1 = arith.constant 1 : index
    %c0_5 = arith.constant 0 : index
    %9 = vector.load %arg2[%c1, %c0_5] : memref<2x128xf32, #tpu.memory_space<vmem>>, vector<1x128xf32>
    %10 = vector.extract_strided_slice %7 {offsets = [0, 0], sizes = [16, 128], strides = [1, 1]} : vector<48x128xf32> to vector<16x128xf32>
    %11 = vector.extract_strided_slice %7 {offsets = [16, 0], sizes = [16, 128], strides = [1, 1]} : vector<48x128xf32> to vector<16x128xf32>
    %12 = arith.addf %10, %11 : vector<16x128xf32>
    %13 = vector.extract_strided_slice %7 {offsets = [32, 0], sizes = [16, 128], strides = [1, 1]} : vector<48x128xf32> to vector<16x128xf32>
    %14 = arith.addf %12, %13 : vector<16x128xf32>
    %15 = vector.broadcast %8 : vector<1x128xf32> to vector<16x128xf32>
    %16 = arith.addf %14, %15 : vector<16x128xf32>
    %17 = math.tanh %16 : vector<16x128xf32>
    %18 = vector.shape_cast %17 : vector<16x128xf32> to vector<2x8x128xf32>
    %19 = vector.shape_cast %9 : vector<1x128xf32> to vector<1x1x128xf32>
    %20 = vector.broadcast %19 : vector<1x1x128xf32> to vector<2x8x128xf32>
    %21 = arith.mulf %18, %20 : vector<2x8x128xf32>
    %cst_6 = arith.constant dense<0.000000e+00> : vector<2x8xf32>
    %22 = vector.multi_reduction <add>, %21, %cst_6 [2] : vector<2x8x128xf32> to vector<2x8xf32>
    %c0_7 = arith.constant 0 : index
    %c0_8 = arith.constant 0 : index
    %23 = vector.load %arg3[%c0_7, %c0_8] : memref<2x8xf32, #tpu.memory_space<vmem>>, vector<2x8xf32>
    %cst_9 = arith.constant 0.000000e+00 : f32
    %24 = vector.broadcast %cst_9 : f32 to vector<2x8xf32>
    %25 = arith.cmpf ogt, %23, %24 : vector<2x8xf32>
    %cst_10 = arith.constant -1.000000e+30 : f32
    %26 = vector.broadcast %cst_10 : f32 to vector<2x8xf32>
    %27 = arith.select %25, %22, %26 : vector<2x8xi1>, vector<2x8xf32>
    %cst_11 = arith.constant dense<0xFF800000> : vector<2xf32>
    %28 = vector.multi_reduction <maximumf>, %27, %cst_11 [1] : vector<2x8xf32> to vector<2xf32>
    %29 = vector.shape_cast %28 : vector<2xf32> to vector<2x1xf32>
    %30 = vector.broadcast %29 : vector<2x1xf32> to vector<2x8xf32>
    %31 = arith.subf %27, %30 : vector<2x8xf32>
    %32 = math.exp %31 : vector<2x8xf32>
    %cst_12 = arith.constant dense<0.000000e+00> : vector<2xf32>
    %33 = vector.multi_reduction <add>, %32, %cst_12 [1] : vector<2x8xf32> to vector<2xf32>
    %34 = vector.shape_cast %33 : vector<2xf32> to vector<2x1xf32>
    %35 = vector.broadcast %34 : vector<2x1xf32> to vector<2x8xf32>
    %36 = arith.divf %32, %35 : vector<2x8xf32>
    %c0_13 = arith.constant 0 : index
    %c0_14 = arith.constant 0 : index
    %37 = vector.load %arg5[%c0_13, %c0_14] : memref<2x8xf32, #tpu.memory_space<vmem>>, vector<2x8xf32>
    tpu.vector_store %arg5[%c0_13, %c0_14], %36 {strides = array<i32>} : memref<2x8xf32, #tpu.memory_space<vmem>>, vector<2x8xf32>,
    %38 = vector.shape_cast %36 : vector<2x8xf32> to vector<2x1x8xf32>
    "tpu.trace_start"() <{level = 10 : i32, message = "bql,bld->bqd"}> : () -> ()
    %cst_15 = arith.constant dense<0.000000e+00> : vector<2x1x128xf32>
    %39 = tpu.matmul %38, %18, %cst_15 {dimension_numbers = #tpu.dot_dimension_numbers<[2], [1], [1], [2], [0, 0, 0, 1, 1, 2], [0], [0]>, precision = #tpu.contract_precision<fp32>} : vector<2x1x8xf32>, vector<2x8x128xf32>, vector<2x1x128xf32> -> vector<2x1x128xf32>
    "tpu.trace_stop"() : () -> ()
    %40 = vector.shape_cast %39 : vector<2x1x128xf32> to vector<2x128xf32>
    %c0_16 = arith.constant 0 : index
    %c0_17 = arith.constant 0 : index
    %41 = vector.load %arg4[%c0_16, %c0_17] : memref<2x128xf32, #tpu.memory_space<vmem>>, vector<2x128xf32>
    tpu.vector_store %arg4[%c0_16, %c0_17], %40 {strides = array<i32>} : memref<2x128xf32, #tpu.memory_space<vmem>>, vector<2x128xf32>,
    return
  }
}

</mosaic_0001>

<llo_original>
// kernel: tpu_custom_call.1
$region0: #{tpu_custom_call.1}
  #allocation0 [shape = 'u32[]', space=smem, size = 0x4, offset = 0x4, fixed_abs, tag = 'smem constant byte address 0x4 - core index']
  #allocation1 [shape = 'u32[144,128]{1,0:T(1,128)}', space=vmem, size = 0x12000, scoped, tag = 'internal scratch']
  %s0 = inlined_call_operand.vmem [shape: s32[48,1], index: 0, kind: input, shape index: {}]
  %s1 = inlined_call_operand.hbm [shape: f32[140,128], index: 1, kind: input, shape index: {}]
  %s2 = inlined_call_operand.vmem [shape: f32[2,128], index: 2, kind: input, shape index: {}]
  %s3 = inlined_call_operand.vmem [shape: f32[2,8], index: 3, kind: input, shape index: {}]
  %s4 = inlined_call_operand.hbm [shape: f32[2,128], index: 4, kind: output, shape index: {0}]
  %s5 = inlined_call_operand.hbm [shape: f32[2,8], index: 5, kind: output, shape index: {1}]
  %6 = xla_tuple %s4, %s5
  %s7 = sld [smem:[#allocation0]]
  $region38: #{tpu_custom_call.1} parent=0
    _
  %s9 = ssub.s32 1, %s7
  %s10 = scalar_select 0, %s9, %s7
  $region1: #{tpu_custom_call.1} parent=0
    #allocation2 [shape = 'u8[73728]{0}', space=vmem, size = 0x12000, scoped, tag = 'input window, operand 1, single buffered']
    #allocation3 [shape = 's32[1]{0}', space=sflag, size = 0x4, scoped, tag = 'scoped memory for tpu_custom_call.1']
    #allocation4 [shape = 's32[1]{0}', space=sflag, size = 0x4, scoped, tag = 'scoped memory for tpu_custom_call.1']
    #allocation5 [shape = 'u8[1024]{0}', space=vmem, size = 0x400, scoped, tag = 'output window, operand 0, single buffered']
    #allocation6 [shape = 'u8[1024]{0}', space=vmem, size = 0x400, scoped, tag = 'output window, operand 1, single buffered']
    #allocation7 [shape = 's32[1]{0}', space=sflag, size = 0x4, scoped, tag = 'scoped memory for tpu_custom_call.1']
    %11 = vsyncpa [#allocation3], 0
    %12 = vsyncpa [#allocation4], 0
    %13 = vsyncpa [#allocation7], 0
    // Predicated region
    $region2: #{tpu_custom_call.1} parent=1 // pred_check
      _
    $region3: #{tpu_custom_call.1} parent=1 // pred_check_branch
      %15 = sbr.rel (0) target = $region5
    $region4: #{tpu_custom_call.1} parent=1 // pred_region
      _
    $region5: #{tpu_custom_call.1} parent=1 // pred_fallthru
      _
    // Predicated region
    $region6: #{tpu_custom_call.1} parent=1 // pred_check
      _
    $region7: #{tpu_custom_call.1} parent=1 // pred_check_branch
      %17 = sbr.rel (0) target = $region9
    $region8: #{tpu_custom_call.1} parent=1 // pred_region
      %s19 = ssub.s32 2304, 2304
      %20 = vsyncadd [#allocation3], %s19
      %s21 = sshll.u32 [#allocation2], 4
      %s22 = int_to_ptr.vmem [resolvable:$true] %s21
      %27 = dma.hbm_to_vmem [thread:$0]  %s1, 2304, %s22, [#allocation3], 128, 128, 8
    $region9: #{tpu_custom_call.1} parent=1 // pred_fallthru
      _
    // Predicated region
    $region10: #{tpu_custom_call.1} parent=1 // pred_check
      _
    $region11: #{tpu_custom_call.1} parent=1 // pred_check_branch
      %29 = sbr.rel (0) target = $region13
    $region12: #{tpu_custom_call.1} parent=1 // pred_region
      _
    $region13: #{tpu_custom_call.1} parent=1 // pred_fallthru
      _
    // Predicated region
    $region14: #{tpu_custom_call.1} parent=1 // pred_check
      _
    $region15: #{tpu_custom_call.1} parent=1 // pred_check_branch
      %31 = sbr.rel (0) target = $region17
    $region16: #{tpu_custom_call.1} parent=1 // pred_region
      _
    $region17: #{tpu_custom_call.1} parent=1 // pred_fallthru
      _
    // Predicated region
    $region18: #{tpu_custom_call.1} parent=1 // pred_check
      _
    $region19: #{tpu_custom_call.1} parent=1 // pred_check_branch
      %33 = sbr.rel (0) target = $region21
    $region20: #{tpu_custom_call.1} parent=1 // pred_region
      %34 = dma.done [#allocation3], 2304
    $region21: #{tpu_custom_call.1} parent=1 // pred_fallthru
      _
    %v35 = vlaneseq
    %v36 = vand.u32 %v35, 127
    %v37 = vadd.s32 %v36, 128
    %v38 = vld [vmem:[%s0] sm:$0xff]
    %v39 = vld [vmem:[%s0 + $0x8] sm:$0xff]
    %v40 = vld [vmem:[%s0 + $0x10] sm:$0xff]
    %v41 = vld [vmem:[%s0 + $0x18] sm:$0xff]
    %v42 = vld [vmem:[%s0 + $0x20] sm:$0xff]
    %v43 = vld [vmem:[%s0 + $0x28] sm:$0xff]
    %44 = vset.pattern.permute.xlu0 0
    %45 = vperm.xlu0 %44, %v38
    %v46 = vpop.permute.xlu0 %45
    %47 = vset.pattern.permute.xlu0 0
    %48 = vperm.xlu0 %47, %v39
    %v49 = vpop.permute.xlu0 %48
    %50 = vset.pattern.permute.xlu0 0
    %51 = vperm.xlu0 %50, %v40
    %v52 = vpop.permute.xlu0 %51
    %53 = vset.pattern.permute.xlu0 0
    %54 = vperm.xlu0 %53, %v41
    %v55 = vpop.permute.xlu0 %54
    %56 = vset.pattern.permute.xlu0 0
    %57 = vperm.xlu0 %56, %v42
    %v58 = vpop.permute.xlu0 %57
    %59 = vset.pattern.permute.xlu0 0
    %60 = vperm.xlu0 %59, %v43
    %v61 = vpop.permute.xlu0 %60
    %vm62 = vcmp.eq.s32.totalorder %v36, %v46
    %vm63 = vcmp.eq.s32.totalorder %v37, %v46
    %vm64 = vcmp.eq.s32.totalorder %v36, %v49
    %vm65 = vcmp.eq.s32.totalorder %v37, %v49
    %vm66 = vcmp.eq.s32.totalorder %v36, %v52
    %vm67 = vcmp.eq.s32.totalorder %v37, %v52
    %vm68 = vcmp.eq.s32.totalorder %v36, %v55
    %vm69 = vcmp.eq.s32.totalorder %v37, %v55
    %vm70 = vcmp.eq.s32.totalorder %v36, %v58
    %vm71 = vcmp.eq.s32.totalorder %v37, %v58
    %vm72 = vcmp.eq.s32.totalorder %v36, %v61
    %vm73 = vcmp.eq.s32.totalorder %v37, %v61
    %v74 = vsel %vm62, 1, 0
    %v75 = vsel %vm63, 1, 0
    %v76 = vsel %vm64, 1, 0
    %v77 = vsel %vm65, 1, 0
    %v78 = vsel %vm66, 1, 0
    %v79 = vsel %vm67, 1, 0
    %v80 = vsel %vm68, 1, 0
    %v81 = vsel %vm69, 1, 0
    %v82 = vsel %vm70, 1, 0
    %v83 = vsel %vm71, 1, 0
    %v84 = vsel %vm72, 1, 0
    %v85 = vsel %vm73, 1, 0
    %v86 = vcvt.s32.f32 %v74
    %v87 = vcvt.s32.f32 %v75
    %v88 = vcvt.s32.f32 %v76
    %v89 = vcvt.s32.f32 %v77
    %v90 = vcvt.s32.f32 %v78
    %v91 = vcvt.s32.f32 %v79
    %v92 = vcvt.s32.f32 %v80
    %v93 = vcvt.s32.f32 %v81
    %v94 = vcvt.s32.f32 %v82
    %v95 = vcvt.s32.f32 %v83
    %v96 = vcvt.s32.f32 %v84
    %v97 = vcvt.s32.f32 %v85
    %v98 = vld [vmem:[#allocation2] sm:$0xff]
    %v99 = vld [vmem:[#allocation2 + $0x8] sm:$0xff]
    %v100 = vld [vmem:[#allocation2 + $0x10] sm:$0xff]
    %v101 = vld [vmem:[#allocation2 + $0x18] sm:$0xff]
    %v102 = vld [vmem:[#allocation2 + $0x20] sm:$0xff]
    %v103 = vld [vmem:[#allocation2 + $0x28] sm:$0xff]
    %v104 = vld [vmem:[#allocation2 + $0x30] sm:$0xff]
    %v105 = vld [vmem:[#allocation2 + $0x38] sm:$0xff]
    %v106 = vld [vmem:[#allocation2 + $0x40] sm:$0xff]
    %v107 = vld [vmem:[#allocation2 + $0x48] sm:$0xff]
    %v108 = vld [vmem:[#allocation2 + $0x50] sm:$0xff]
    %v109 = vld [vmem:[#allocation2 + $0x58] sm:$0xff]
    %v110 = vld [vmem:[#allocation2 + $0x60] sm:$0xff]
    %v111 = vld [vmem:[#allocation2 + $0x68] sm:$0xff]
    %v112 = vld [vmem:[#allocation2 + $0x70] sm:$0xff]
    %v113 = vld [vmem:[#allocation2 + $0x78] sm:$0xff]
    %v114 = vld [vmem:[#allocation2 + $0x80] sm:$0xff]
    %v115 = vld [vmem:[#allocation2 + $0x88] sm:$0xf]
    %vm116 = vcmask 97280
    %v118 = vsel %vm116, %v87, 0
    %v121 = vsel %vm116, %v89, 0
    %v124 = vsel %vm116, %v91, 0
    %v127 = vsel %vm116, %v93, 0
    %v130 = vsel %vm116, %v95, 0
    %v133 = vsel %vm116, %v97, 0
    %vm135 = vcmask 1043456
    %v137 = vsel %vm135, %v115, 0
    %139 = vmatprep.subr.mxu0 0.0
    %v140 = vand.u32 %v98, 4294901760
    %141 = vmatpush1.msra.mxu0 %v140
    %142 = vmatprep.subr.mxu0 0.0
    %v143 = vand.u32 %v99, 4294901760
    %144 = vmatpush1.msra.mxu0 %v143
    %145 = vmatprep.subr.mxu0 0.0
    %v146 = vand.u32 %v100, 4294901760
    %147 = vmatpush1.msra.mxu0 %v146
    %148 = vmatprep.subr.mxu0 0.0
    %v149 = vand.u32 %v101, 4294901760
    %150 = vmatpush1.msra.mxu0 %v149
    %151 = vmatprep.subr.mxu0 0.0
    %v152 = vand.u32 %v102, 4294901760
    %153 = vmatpush1.msra.mxu0 %v152
    %154 = vmatprep.subr.mxu0 0.0
    %v155 = vand.u32 %v103, 4294901760
    %156 = vmatpush1.msra.mxu0 %v155
    %157 = vmatprep.subr.mxu0 0.0
    %v158 = vand.u32 %v104, 4294901760
    %159 = vmatpush1.msra.mxu0 %v158
    %160 = vmatprep.subr.mxu0 0.0
    %v161 = vand.u32 %v105, 4294901760
    %162 = vmatpush1.msra.mxu0 %v161
    %163 = vmatprep.subr.mxu0 0.0
    %v164 = vand.u32 %v106, 4294901760
    %165 = vmatpush1.msra.mxu0 %v164
    %166 = vmatprep.subr.mxu0 0.0
    %v167 = vand.u32 %v107, 4294901760
    %168 = vmatpush1.msra.mxu0 %v167
    %169 = vmatprep.subr.mxu0 0.0
    %v170 = vand.u32 %v108, 4294901760
    %171 = vmatpush1.msra.mxu0 %v170
    %172 = vmatprep.subr.mxu0 0.0
    %v173 = vand.u32 %v109, 4294901760
    %174 = vmatpush1.msra.mxu0 %v173
    %175 = vmatprep.subr.mxu0 0.0
    %v176 = vand.u32 %v110, 4294901760
    %177 = vmatpush1.msra.mxu0 %v176
    %178 = vmatprep.subr.mxu0 0.0
    %v179 = vand.u32 %v111, 4294901760
    %180 = vmatpush1.msra.mxu0 %v179
    %181 = vmatprep.subr.mxu0 0.0
    %v182 = vand.u32 %v112, 4294901760
    %183 = vmatpush1.msra.mxu0 %v182
    %184 = vmatprep.subr.mxu0 0.0
    %v185 = vand.u32 %v113, 4294901760
    %186 = vmatpush1.msra.mxu0 %v185
    %187 = vmatprep.subr.mxu0 0.0
    %v188 = vand.u32 %v114, 4294901760
    %189 = vmatpush1.msra.mxu0 %v188
    %190 = vmatprep.subr.mxu0 0.0
    %v191 = vand.u32 %v137, 4294901760
    %192 = vmatpush1.msra.mxu0 %v191
    %193 = vmatprep.subr.mxu0 0.0
    %194 = vmatpush1.msra.mxu0 0.0
    %195 = vmatprep.subr.mxu0 0.0
    %196 = vmatpush1.msra.mxu0 0.0
    %197 = vmatprep.subr.mxu0 0.0
    %198 = vmatpush1.msra.mxu0 0.0
    %199 = vmatprep.subr.mxu0 0.0
    %200 = vmatpush1.msra.mxu0 0.0
    %201 = vmatprep.subr.mxu0 0.0
    %202 = vmatpush1.msra.mxu0 0.0
    %203 = vmatprep.subr.mxu0 0.0
    %204 = vmatpush1.msra.mxu0 0.0
    %205 = vmatprep.subr.mxu0 0.0
    %206 = vmatpush1.msra.mxu0 0.0
    %207 = vmatprep.subr.mxu0 0.0
    %208 = vmatpush1.msra.mxu0 0.0
    %209 = vmatprep.subr.mxu0 0.0
    %210 = vmatpush1.msra.mxu0 0.0
    %211 = vmatprep.subr.mxu0 0.0
    %212 = vmatpush1.msra.mxu0 0.0
    %213 = vmatprep.subr.mxu0 0.0
    %214 = vmatpush1.msra.mxu0 0.0
    %215 = vmatprep.subr.mxu0 0.0
    %216 = vmatpush1.msra.mxu0 0.0
    %217 = vmatprep.subr.mxu0 0.0
    %218 = vmatpush1.msra.mxu0 0.0
    %219 = vmatprep.subr.mxu0 0.0
    %220 = vmatpush1.msra.mxu0 0.0
    %v221 = vand.u32 %v118, 4294901760
    %v222 = vsub.f32 %v118, %v221
    %v223 = vand.u32 %v222, 4294901760
    %v224 = vsub.f32 %v222, %v223
    %v225 = vand.u32 %v224, 4294901760
    %226 = vmatprep.mubr.f32.mxu0 %v225
    %v227 = vand.u32 %v86, 4294901760
    %v228 = vsub.f32 %v86, %v227
    %v229 = vand.u32 %v228, 4294901760
    %v230 = vsub.f32 %v228, %v229
    %v231 = vand.u32 %v230, 4294901760
    %232 = vmatmul.mubr.f32.gmra.mrb[0].mxu0 %v231
    %v233 = vpop.f32.mrb[0].mxu0
    %v234 = vadd.f32 0.0, %v233
    %v235 = vpop.f32.mrb[0].mxu0
    %v236 = vand.u32 %v121, 4294901760
    %v237 = vsub.f32 %v121, %v236
    %v238 = vand.u32 %v237, 4294901760
    %v239 = vsub.f32 %v237, %v238
    %v240 = vand.u32 %v239, 4294901760
    %241 = vmatprep.mubr.f32.mxu0 %v240
    %v242 = vand.u32 %v88, 4294901760
    %v243 = vsub.f32 %v88, %v242
    %v244 = vand.u32 %v243, 4294901760
    %v245 = vsub.f32 %v243, %v244
    %v246 = vand.u32 %v245, 4294901760
    %247 = vmatmul.mubr.f32.gmra.mrb[0].mxu0 %v246
    %v248 = vpop.f32.mrb[0].mxu0
    %v249 = vadd.f32 0.0, %v248
    %v250 = vpop.f32.mrb[0].mxu0
    %v251 = vand.u32 %v124, 4294901760
    %v252 = vsub.f32 %v124, %v251
    %v253 = vand.u32 %v252, 4294901760
    %v254 = vsub.f32 %v252, %v253
    %v255 = vand.u32 %v254, 4294901760
    %256 = vmatprep.mubr.f32.mxu0 %v255
    %v257 = vand.u32 %v90, 4294901760
    %v258 = vsub.f32 %v90, %v257
    %v259 = vand.u32 %v258, 4294901760
    %v260 = vsub.f32 %v258, %v259
    %v261 = vand.u32 %v260, 4294901760
    %262 = vmatmul.mubr.f32.gmra.mrb[0].mxu0 %v261
    %v263 = vpop.f32.mrb[0].mxu0
    %v264 = vadd.f32 0.0, %v263
    %v265 = vpop.f32.mrb[0].mxu0
    %v266 = vand.u32 %v127, 4294901760
    %v267 = vsub.f32 %v127, %v266
    %v268 = vand.u32 %v267, 4294901760
    %v269 = vsub.f32 %v267, %v268
    %v270 = vand.u32 %v269, 4294901760
    %271 = vmatprep.mubr.f32.mxu0 %v270
    %v272 = vand.u32 %v92, 4294901760
    %v273 = vsub.f32 %v92, %v272
    %v274 = vand.u32 %v273, 4294901760
    %v275 = vsub.f32 %v273, %v274
    %v276 = vand.u32 %v275, 4294901760
    %277 = vmatmul.mubr.f32.gmra.mrb[0].mxu0 %v276
    %v278 = vpop.f32.mrb[0].mxu0
    %v279 = vadd.f32 0.0, %v278
    %v280 = vpop.f32.mrb[0].mxu0
    %v281 = vand.u32 %v130, 4294901760
    %v282 = vsub.f32 %v130, %v281
    %v283 = vand.u32 %v282, 4294901760
    %v284 = vsub.f32 %v282, %v283
    %v285 = vand.u32 %v284, 4294901760
    %286 = vmatprep.mubr.f32.mxu0 %v285
    %v287 = vand.u32 %v94, 4294901760
    %v288 = vsub.f32 %v94, %v287
    %v289 = vand.u32 %v288, 4294901760
    %v290 = vsub.f32 %v288, %v289
    %v291 = vand.u32 %v290, 4294901760
    %292 = vmatmul.mubr.f32.gmra.mrb[0].mxu0 %v291
    %v293 = vpop.f32.mrb[0].mxu0
    %v294 = vadd.f32 0.0, %v293
    %v295 = vpop.f32.mrb[0].mxu0
    %v296 = vand.u32 %v133, 4294901760
    %v297 = vsub.f32 %v133, %v296
    %v298 = vand.u32 %v297, 4294901760
    %v299 = vsub.f32 %v297, %v298
    %v300 = vand.u32 %v299, 4294901760
    %301 = vmatprep.mubr.f32.mxu0 %v300
    %v302 = vand.u32 %v96, 4294901760
    %v303 = vsub.f32 %v96, %v302
    %v304 = vand.u32 %v303, 4294901760
    %v305 = vsub.f32 %v303, %v304
    %v306 = vand.u32 %v305, 4294901760
    %307 = vmatmul.mubr.f32.gmra.mrb[0].mxu0 %v306
    %v308 = vpop.f32.mrb[0].mxu0
    %v309 = vadd.f32 0.0, %v308
    %v310 = vpop.f32.mrb[0].mxu0
    %311 = vdwg.mxu0
    %312 = vmatprep.subr.mxu0 0.0
    %v313 = vand.u32 %v98, 4294901760
    %v314 = vsub.f32 %v98, %v313
    %v315 = vand.u32 %v314, 4294901760
    %v316 = vsub.f32 %v314, %v315
    %v317 = vand.u32 %v316, 4294901760
    %318 = vmatpush1.msra.mxu0 %v317
    %319 = vmatprep.subr.mxu0 0.0
    %v320 = vand.u32 %v99, 4294901760
    %v321 = vsub.f32 %v99, %v320
    %v322 = vand.u32 %v321, 4294901760
    %v323 = vsub.f32 %v321, %v322
    %v324 = vand.u32 %v323, 4294901760
    %325 = vmatpush1.msra.mxu0 %v324
    %326 = vmatprep.subr.mxu0 0.0
    %v327 = vand.u32 %v100, 4294901760
    %v328 = vsub.f32 %v100, %v327
    %v329 = vand.u32 %v328, 4294901760
    %v330 = vsub.f32 %v328, %v329
    %v331 = vand.u32 %v330, 4294901760
    %332 = vmatpush1.msra.mxu0 %v331
    %333 = vmatprep.subr.mxu0 0.0
    %v334 = vand.u32 %v101, 4294901760
    %v335 = vsub.f32 %v101, %v334
    %v336 = vand.u32 %v335, 4294901760
    %v337 = vsub.f32 %v335, %v336
    %v338 = vand.u32 %v337, 4294901760
    %339 = vmatpush1.msra.mxu0 %v338
    %340 = vmatprep.subr.mxu0 0.0
    %v341 = vand.u32 %v102, 4294901760
    %v342 = vsub.f32 %v102, %v341
    %v343 = vand.u32 %v342, 4294901760
    %v344 = vsub.f32 %v342, %v343
    %v345 = vand.u32 %v344, 4294901760
    %346 = vmatpush1.msra.mxu0 %v345
    %347 = vmatprep.subr.mxu0 0.0
    %v348 = vand.u32 %v103, 4294901760
    %v349 = vsub.f32 %v103, %v348
    %v350 = vand.u32 %v349, 4294901760
    %v351 = vsub.f32 %v349, %v350
    %v352 = vand.u32 %v351, 4294901760
    %353 = vmatpush1.msra.mxu0 %v352
    %354 = vmatprep.subr.mxu0 0.0
    %v355 = vand.u32 %v104, 4294901760
    %v356 = vsub.f32 %v104, %v355
    %v357 = vand.u32 %v356, 4294901760
    %v358 = vsub.f32 %v356, %v357
    %v359 = vand.u32 %v358, 4294901760
    %360 = vmatpush1.msra.mxu0 %v359
    %361 = vmatprep.subr.mxu0 0.0
    %v362 = vand.u32 %v105, 4294901760
    %v363 = vsub.f32 %v105, %v362
    %v364 = vand.u32 %v363, 4294901760
    %v365 = vsub.f32 %v363, %v364
    %v366 = vand.u32 %v365, 4294901760
    %367 = vmatpush1.msra.mxu0 %v366
    %368 = vmatprep.subr.mxu0 0.0
    %v369 = vand.u32 %v106, 4294901760
    %v370 = vsub.f32 %v106, %v369
    %v371 = vand.u32 %v370, 4294901760
    %v372 = vsub.f32 %v370, %v371
    %v373 = vand.u32 %v372, 4294901760
    %374 = vmatpush1.msra.mxu0 %v373
    %375 = vmatprep.subr.mxu0 0.0
    %v376 = vand.u32 %v107, 4294901760
    %v377 = vsub.f32 %v107, %v376
    %v378 = vand.u32 %v377, 4294901760
    %v379 = vsub.f32 %v377, %v378
    %v380 = vand.u32 %v379, 4294901760
    %381 = vmatpush1.msra.mxu0 %v380
    %382 = vmatprep.subr.mxu0 0.0
    %v383 = vand.u32 %v108, 4294901760
    %v384 = vsub.f32 %v108, %v383
    %v385 = vand.u32 %v384, 4294901760
    %v386 = vsub.f32 %v384, %v385
    %v387 = vand.u32 %v386, 4294901760
    %388 = vmatpush1.msra.mxu0 %v387
    %389 = vmatprep.subr.mxu0 0.0
    %v390 = vand.u32 %v109, 4294901760
    %v391 = vsub.f32 %v109, %v390
    %v392 = vand.u32 %v391, 4294901760
    %v393 = vsub.f32 %v391, %v392
    %v394 = vand.u32 %v393, 4294901760
    %395 = vmatpush1.msra.mxu0 %v394
    %396 = vmatprep.subr.mxu0 0.0
    %v397 = vand.u32 %v110, 4294901760
    %v398 = vsub.f32 %v110, %v397
    %v399 = vand.u32 %v398, 4294901760
    %v400 = vsub.f32 %v398, %v399
    %v401 = vand.u32 %v400, 4294901760
    %402 = vmatpush1.msra.mxu0 %v401
    %403 = vmatprep.subr.mxu0 0.0
    %v404 = vand.u32 %v111, 4294901760
    %v405 = vsub.f32 %v111, %v404
    %v406 = vand.u32 %v405, 4294901760
    %v407 = vsub.f32 %v405, %v406
    %v408 = vand.u32 %v407, 4294901760
    %409 = vmatpush1.msra.mxu0 %v408
    %410 = vmatprep.subr.mxu0 0.0
    %v411 = vand.u32 %v112, 4294901760
    %v412 = vsub.f32 %v112, %v411
    %v413 = vand.u32 %v412, 4294901760
    %v414 = vsub.f32 %v412, %v413
    %v415 = vand.u32 %v414, 4294901760
    %416 = vmatpush1.msra.mxu0 %v415
    %417 = vmatprep.subr.mxu0 0.0
    %v418 = vand.u32 %v113, 4294901760
    %v419 = vsub.f32 %v113, %v418
    %v420 = vand.u32 %v419, 4294901760
    %v421 = vsub.f32 %v419, %v420
    %v422 = vand.u32 %v421, 4294901760
    %423 = vmatpush1.msra.mxu0 %v422
    %424 = vmatprep.subr.mxu0 0.0
    %v425 = vand.u32 %v114, 4294901760
    %v426 = vsub.f32 %v114, %v425
    %v427 = vand.u32 %v426, 4294901760
    %v428 = vsub.f32 %v426, %v427
    %v429 = vand.u32 %v428, 4294901760
    %430 = vmatpush1.msra.mxu0 %v429
    %431 = vmatprep.subr.mxu0 0.0
    %v432 = vand.u32 %v137, 4294901760
    %v433 = vsub.f32 %v137, %v432
    %v434 = vand.u32 %v433, 4294901760
    %v435 = vsub.f32 %v433, %v434
    %v436 = vand.u32 %v435, 4294901760
    %437 = vmatpush1.msra.mxu0 %v436
    %438 = vmatprep.subr.mxu0 0.0
    %439 = vmatpush1.msra.mxu0 0.0
    %440 = vmatprep.subr.mxu0 0.0
    %441 = vmatpush1.msra.mxu0 0.0
    %442 = vmatprep.subr.mxu0 0.0
    %443 = vmatpush1.msra.mxu0 0.0
    %444 = vmatprep.subr.mxu0 0.0
    %445 = vmatpush1.msra.mxu0 0.0
    %446 = vmatprep.subr.mxu0 0.0
    %447 = vmatpush1.msra.mxu0 0.0
    %448 = vmatprep.subr.mxu0 0.0
    %449 = vmatpush1.msra.mxu0 0.0
    %450 = vmatprep.subr.mxu0 0.0
    %451 = vmatpush1.msra.mxu0 0.0
    %452 = vmatprep.subr.mxu0 0.0
    %453 = vmatpush1.msra.mxu0 0.0
    %454 = vmatprep.subr.mxu0 0.0
    %455 = vmatpush1.msra.mxu0 0.0
    %456 = vmatprep.subr.mxu0 0.0
    %457 = vmatpush1.msra.mxu0 0.0
    %458 = vmatprep.subr.mxu0 0.0
    %459 = vmatpush1.msra.mxu0 0.0
    %460 = vmatprep.subr.mxu0 0.0
    %461 = vmatpush1.msra.mxu0 0.0
    %462 = vmatprep.subr.mxu0 0.0
    %463 = vmatpush1.msra.mxu0 0.0
    %464 = vmatprep.subr.mxu0 0.0
    %465 = vmatpush1.msra.mxu0 0.0
    %v466 = vand.u32 %v118, 4294901760
    %467 = vmatprep.mubr.f32.mxu0 %v466
    %v468 = vand.u32 %v86, 4294901760
    %469 = vmatmul.mubr.f32.gmra.mrb[0].mxu0 %v468
    %v470 = vpop.f32.mrb[0].mxu0
    %v471 = vadd.f32 %v234, %v470
    %v472 = vpop.f32.mrb[0].mxu0
    %v473 = vand.u32 %v121, 4294901760
    %474 = vmatprep.mubr.f32.mxu0 %v473
    %v475 = vand.u32 %v88, 4294901760
    %476 = vmatmul.mubr.f32.gmra.mrb[0].mxu0 %v475
    %v477 = vpop.f32.mrb[0].mxu0
    %v478 = vadd.f32 %v249, %v477
    %v479 = vpop.f32.mrb[0].mxu0
    %v480 = vand.u32 %v124, 4294901760
    %481 = vmatprep.mubr.f32.mxu0 %v480
    %v482 = vand.u32 %v90, 4294901760
    %483 = vmatmul.mubr.f32.gmra.mrb[0].mxu0 %v482
    %v484 = vpop.f32.mrb[0].mxu0
    %v485 = vadd.f32 %v264, %v484
    %v486 = vpop.f32.mrb[0].mxu0
    %v487 = vand.u32 %v127, 4294901760
    %488 = vmatprep.mubr.f32.mxu0 %v487
    %v489 = vand.u32 %v92, 4294901760
    %490 = vmatmul.mubr.f32.gmra.mrb[0].mxu0 %v489
    %v491 = vpop.f32.mrb[0].mxu0
    %v492 = vadd.f32 %v279, %v491
    %v493 = vpop.f32.mrb[0].mxu0
    %v494 = vand.u32 %v130, 4294901760
    %495 = vmatprep.mubr.f32.mxu0 %v494
    %v496 = vand.u32 %v94, 4294901760
    %497 = vmatmul.mubr.f32.gmra.mrb[0].mxu0 %v496
    %v498 = vpop.f32.mrb[0].mxu0
    %v499 = vadd.f32 %v294, %v498
    %v500 = vpop.f32.mrb[0].mxu0
    %v501 = vand.u32 %v133, 4294901760
    %502 = vmatprep.mubr.f32.mxu0 %v501
    %v503 = vand.u32 %v96, 4294901760
    %504 = vmatmul.mubr.f32.gmra.mrb[0].mxu0 %v503
    %v505 = vpop.f32.mrb[0].mxu0
    %v506 = vadd.f32 %v309, %v505
    %v507 = vpop.f32.mrb[0].mxu0
    %508 = vdwg.mxu0
    %509 = vmatprep.subr.mxu0 0.0
    %v510 = vand.u32 %v98, 4294901760
    %v511 = vsub.f32 %v98, %v510
    %512 = vmatpush1.msra.mxu0 %v511
    %513 = vmatprep.subr.mxu0 0.0
    %v514 = vand.u32 %v99, 4294901760
    %v515 = vsub.f32 %v99, %v514
    %516 = vmatpush1.msra.mxu0 %v515
    %517 = vmatprep.subr.mxu0 0.0
    %v518 = vand.u32 %v100, 4294901760
    %v519 = vsub.f32 %v100, %v518
    %520 = vmatpush1.msra.mxu0 %v519
    %521 = vmatprep.subr.mxu0 0.0
    %v522 = vand.u32 %v101, 4294901760
    %v523 = vsub.f32 %v101, %v522
    %524 = vmatpush1.msra.mxu0 %v523
    %525 = vmatprep.subr.mxu0 0.0
    %v526 = vand.u32 %v102, 4294901760
    %v527 = vsub.f32 %v102, %v526
    %528 = vmatpush1.msra.mxu0 %v527
    %529 = vmatprep.subr.mxu0 0.0
    %v530 = vand.u32 %v103, 4294901760
    %v531 = vsub.f32 %v103, %v530
    %532 = vmatpush1.msra.mxu0 %v531
    %533 = vmatprep.subr.mxu0 0.0
    %v534 = vand.u32 %v104, 4294901760
    %v535 = vsub.f32 %v104, %v534
    %536 = vmatpush1.msra.mxu0 %v535
    %537 = vmatprep.subr.mxu0 0.0
    %v538 = vand.u32 %v105, 4294901760
    %v539 = vsub.f32 %v105, %v538
    %540 = vmatpush1.msra.mxu0 %v539
    %541 = vmatprep.subr.mxu0 0.0
    %v542 = vand.u32 %v106, 4294901760
    %v543 = vsub.f32 %v106, %v542
    %544 = vmatpush1.msra.mxu0 %v543
    %545 = vmatprep.subr.mxu0 0.0
    %v546 = vand.u32 %v107, 4294901760
    %v547 = vsub.f32 %v107, %v546
    %548 = vmatpush1.msra.mxu0 %v547
    %549 = vmatprep.subr.mxu0 0.0
    %v550 = vand.u32 %v108, 4294901760
    %v551 = vsub.f32 %v108, %v550
    %552 = vmatpush1.msra.mxu0 %v551
    %553 = vmatprep.subr.mxu0 0.0
    %v554 = vand.u32 %v109, 4294901760
    %v555 = vsub.f32 %v109, %v554
    %556 = vmatpush1.msra.mxu0 %v555
    %557 = vmatprep.subr.mxu0 0.0
    %v558 = vand.u32 %v110, 4294901760
    %v559 = vsub.f32 %v110, %v558
    %560 = vmatpush1.msra.mxu0 %v559
    %561 = vmatprep.subr.mxu0 0.0
    %v562 = vand.u32 %v111, 4294901760
    %v563 = vsub.f32 %v111, %v562
    %564 = vmatpush1.msra.mxu0 %v563
    %565 = vmatprep.subr.mxu0 0.0
    %v566 = vand.u32 %v112, 4294901760
    %v567 = vsub.f32 %v112, %v566
    %568 = vmatpush1.msra.mxu0 %v567
    %569 = vmatprep.subr.mxu0 0.0
    %v570 = vand.u32 %v113, 4294901760
    %v571 = vsub.f32 %v113, %v570
    %572 = vmatpush1.msra.mxu0 %v571
    %573 = vmatprep.subr.mxu0 0.0
    %v574 = vand.u32 %v114, 4294901760
    %v575 = vsub.f32 %v114, %v574
    %576 = vmatpush1.msra.mxu0 %v575
    %577 = vmatprep.subr.mxu0 0.0
    %v578 = vand.u32 %v137, 4294901760
    %v579 = vsub.f32 %v137, %v578
    %580 = vmatpush1.msra.mxu0 %v579
    %581 = vmatprep.subr.mxu0 0.0
    %582 = vmatpush1.msra.mxu0 0.0
    %583 = vmatprep.subr.mxu0 0.0
    %584 = vmatpush1.msra.mxu0 0.0
    %585 = vmatprep.subr.mxu0 0.0
    %586 = vmatpush1.msra.mxu0 0.0
    %587 = vmatprep.subr.mxu0 0.0
    %588 = vmatpush1.msra.mxu0 0.0
    %589 = vmatprep.subr.mxu0 0.0
    %590 = vmatpush1.msra.mxu0 0.0
    %591 = vmatprep.subr.mxu0 0.0
    %592 = vmatpush1.msra.mxu0 0.0
    %593 = vmatprep.subr.mxu0 0.0
    %594 = vmatpush1.msra.mxu0 0.0
    %595 = vmatprep.subr.mxu0 0.0
    %596 = vmatpush1.msra.mxu0 0.0
    %597 = vmatprep.subr.mxu0 0.0
    %598 = vmatpush1.msra.mxu0 0.0
    %599 = vmatprep.subr.mxu0 0.0
    %600 = vmatpush1.msra.mxu0 0.0
    %601 = vmatprep.subr.mxu0 0.0
    %602 = vmatpush1.msra.mxu0 0.0
    %603 = vmatprep.subr.mxu0 0.0
    %604 = vmatpush1.msra.mxu0 0.0
    %605 = vmatprep.subr.mxu0 0.0
    %606 = vmatpush1.msra.mxu0 0.0
    %607 = vmatprep.subr.mxu0 0.0
    %608 = vmatpush1.msra.mxu0 0.0
    %v609 = vand.u32 %v118, 4294901760
    %v610 = vsub.f32 %v118, %v609
    %611 = vmatprep.mubr.f32.mxu0 %v610
    %v612 = vand.u32 %v86, 4294901760
    %v613 = vsub.f32 %v86, %v612
    %614 = vmatmul.mubr.f32.gmra.mrb[0].mxu0 %v613
    %v615 = vpop.f32.mrb[0].mxu0
    %v616 = vadd.f32 %v471, %v615
    %v617 = vpop.f32.mrb[0].mxu0
    %v618 = vand.u32 %v121, 4294901760
    %v619 = vsub.f32 %v121, %v618
    %620 = vmatprep.mubr.f32.mxu0 %v619
    %v621 = vand.u32 %v88, 4294901760
    %v622 = vsub.f32 %v88, %v621
    %623 = vmatmul.mubr.f32.gmra.mrb[0].mxu0 %v622
    %v624 = vpop.f32.mrb[0].mxu0
    %v625 = vadd.f32 %v478, %v624
    %v626 = vpop.f32.mrb[0].mxu0
    %v627 = vand.u32 %v124, 4294901760
    %v628 = vsub.f32 %v124, %v627
    %629 = vmatprep.mubr.f32.mxu0 %v628
    %v630 = vand.u32 %v90, 4294901760
    %v631 = vsub.f32 %v90, %v630
    %632 = vmatmul.mubr.f32.gmra.mrb[0].mxu0 %v631
    %v633 = vpop.f32.mrb[0].mxu0
    %v634 = vadd.f32 %v485, %v633
    %v635 = vpop.f32.mrb[0].mxu0
    %v636 = vand.u32 %v127, 4294901760
    %v637 = vsub.f32 %v127, %v636
    %638 = vmatprep.mubr.f32.mxu0 %v637
    %v639 = vand.u32 %v92, 4294901760
    %v640 = vsub.f32 %v92, %v639
    %641 = vmatmul.mubr.f32.gmra.mrb[0].mxu0 %v640
    %v642 = vpop.f32.mrb[0].mxu0
    %v643 = vadd.f32 %v492, %v642
    %v644 = vpop.f32.mrb[0].mxu0
    %v645 = vand.u32 %v130, 4294901760
    %v646 = vsub.f32 %v130, %v645
    %647 = vmatprep.mubr.f32.mxu0 %v646
    %v648 = vand.u32 %v94, 4294901760
    %v649 = vsub.f32 %v94, %v648
    %650 = vmatmul.mubr.f32.gmra.mrb[0].mxu0 %v649
    %v651 = vpop.f32.mrb[0].mxu0
    %v652 = vadd.f32 %v499, %v651
    %v653 = vpop.f32.mrb[0].mxu0
    %v654 = vand.u32 %v133, 4294901760
    %v655 = vsub.f32 %v133, %v654
    %656 = vmatprep.mubr.f32.mxu0 %v655
    %v657 = vand.u32 %v96, 4294901760
    %v658 = vsub.f32 %v96, %v657
    %659 = vmatmul.mubr.f32.gmra.mrb[0].mxu0 %v658
    %v660 = vpop.f32.mrb[0].mxu0
    %v661 = vadd.f32 %v506, %v660
    %v662 = vpop.f32.mrb[0].mxu0
    %663 = vdwg.mxu0
    %664 = vmatprep.subr.mxu0 0.0
    %v665 = vand.u32 %v98, 4294901760
    %666 = vmatpush1.msra.mxu0 %v665
    %667 = vmatprep.subr.mxu0 0.0
    %v668 = vand.u32 %v99, 4294901760
    %669 = vmatpush1.msra.mxu0 %v668
    %670 = vmatprep.subr.mxu0 0.0
    %v671 = vand.u32 %v100, 4294901760
    %672 = vmatpush1.msra.mxu0 %v671
    %673 = vmatprep.subr.mxu0 0.0
    %v674 = vand.u32 %v101, 4294901760
    %675 = vmatpush1.msra.mxu0 %v674
    %676 = vmatprep.subr.mxu0 0.0
    %v677 = vand.u32 %v102, 4294901760
    %678 = vmatpush1.msra.mxu0 %v677
    %679 = vmatprep.subr.mxu0 0.0
    %v680 = vand.u32 %v103, 4294901760
    %681 = vmatpush1.msra.mxu0 %v680
    %682 = vmatprep.subr.mxu0 0.0
    %v683 = vand.u32 %v104, 4294901760
    %684 = vmatpush1.msra.mxu0 %v683
    %685 = vmatprep.subr.mxu0 0.0
    %v686 = vand.u32 %v105, 4294901760
    %687 = vmatpush1.msra.mxu0 %v686
    %688 = vmatprep.subr.mxu0 0.0
    %v689 = vand.u32 %v106, 4294901760
    %690 = vmatpush1.msra.mxu0 %v689
    %691 = vmatprep.subr.mxu0 0.0
    %v692 = vand.u32 %v107, 4294901760
    %693 = vmatpush1.msra.mxu0 %v692
    %694 = vmatprep.subr.mxu0 0.0
    %v695 = vand.u32 %v108, 4294901760
    %696 = vmatpush1.msra.mxu0 %v695
    %697 = vmatprep.subr.mxu0 0.0
    %v698 = vand.u32 %v109, 4294901760
    %699 = vmatpush1.msra.mxu0 %v698
    %700 = vmatprep.subr.mxu0 0.0
    %v701 = vand.u32 %v110, 4294901760
    %702 = vmatpush1.msra.mxu0 %v701
    %703 = vmatprep.subr.mxu0 0.0
    %v704 = vand.u32 %v111, 4294901760
    %705 = vmatpush1.msra.mxu0 %v704
    %706 = vmatprep.subr.mxu0 0.0
    %v707 = vand.u32 %v112, 4294901760
    %708 = vmatpush1.msra.mxu0 %v707
    %709 = vmatprep.subr.mxu0 0.0
    %v710 = vand.u32 %v113, 4294901760
    %711 = vmatpush1.msra.mxu0 %v710
    %712 = vmatprep.subr.mxu0 0.0
    %v713 = vand.u32 %v114, 4294901760
    %714 = vmatpush1.msra.mxu0 %v713
    %715 = vmatprep.subr.mxu0 0.0
    %v716 = vand.u32 %v137, 4294901760
    %717 = vmatpush1.msra.mxu0 %v716
    %718 = vmatprep.subr.mxu0 0.0
    %719 = vmatpush1.msra.mxu0 0.0
    %720 = vmatprep.subr.mxu0 0.0
    %721 = vmatpush1.msra.mxu0 0.0
    %722 = vmatprep.subr.mxu0 0.0
    %723 = vmatpush1.msra.mxu0 0.0
    %724 = vmatprep.subr.mxu0 0.0
    %725 = vmatpush1.msra.mxu0 0.0
    %726 = vmatprep.subr.mxu0 0.0
    %727 = vmatpush1.msra.mxu0 0.0
    %728 = vmatprep.subr.mxu0 0.0
    %729 = vmatpush1.msra.mxu0 0.0
    %730 = vmatprep.subr.mxu0 0.0
    %731 = vmatpush1.msra.mxu0 0.0
    %732 = vmatprep.subr.mxu0 0.0
    %733 = vmatpush1.msra.mxu0 0.0
    %734 = vmatprep.subr.mxu0 0.0
    %735 = vmatpush1.msra.mxu0 0.0
    %736 = vmatprep.subr.mxu0 0.0
    %737 = vmatpush1.msra.mxu0 0.0
    %738 = vmatprep.subr.mxu0 0.0
    %739 = vmatpush1.msra.mxu0 0.0
    %740 = vmatprep.subr.mxu0 0.0
    %741 = vmatpush1.msra.mxu0 0.0
    %742 = vmatprep.subr.mxu0 0.0
    %743 = vmatpush1.msra.mxu0 0.0
    %744 = vmatprep.subr.mxu0 0.0
    %745 = vmatpush1.msra.mxu0 0.0
    %v746 = vand.u32 %v118, 4294901760
    %v747 = vsub.f32 %v118, %v746
    %v748 = vand.u32 %v747, 4294901760
    %749 = vmatprep.mubr.f32.mxu0 %v748
    %v750 = vand.u32 %v86, 4294901760
    %v751 = vsub.f32 %v86, %v750
    %v752 = vand.u32 %v751, 4294901760
    %753 = vmatmul.mubr.f32.gmra.mrb[0].mxu0 %v752
    %v754 = vpop.f32.mrb[0].mxu0
    %v755 = vadd.f32 %v616, %v754
    %v756 = vpop.f32.mrb[0].mxu0
    %v757 = vand.u32 %v121, 4294901760
    %v758 = vsub.f32 %v121, %v757
    %v759 = vand.u32 %v758, 4294901760
    %760 = vmatprep.mubr.f32.mxu0 %v759
    %v761 = vand.u32 %v88, 4294901760
    %v762 = vsub.f32 %v88, %v761
    %v763 = vand.u32 %v762, 4294901760
    %764 = vmatmul.mubr.f32.gmra.mrb[0].mxu0 %v763
    %v765 = vpop.f32.mrb[0].mxu0
    %v766 = vadd.f32 %v625, %v765
    %v767 = vpop.f32.mrb[0].mxu0
    %v768 = vand.u32 %v124, 4294901760
    %v769 = vsub.f32 %v124, %v768
    %v770 = vand.u32 %v769, 4294901760
    %771 = vmatprep.mubr.f32.mxu0 %v770
    %v772 = vand.u32 %v90, 4294901760
    %v773 = vsub.f32 %v90, %v772
    %v774 = vand.u32 %v773, 4294901760
    %775 = vmatmul.mubr.f32.gmra.mrb[0].mxu0 %v774
    %v776 = vpop.f32.mrb[0].mxu0
    %v777 = vadd.f32 %v634, %v776
    %v778 = vpop.f32.mrb[0].mxu0
    %v779 = vand.u32 %v127, 4294901760
    %v780 = vsub.f32 %v127, %v779
    %v781 = vand.u32 %v780, 4294901760
    %782 = vmatprep.mubr.f32.mxu0 %v781
    %v783 = vand.u32 %v92, 4294901760
    %v784 = vsub.f32 %v92, %v783
    %v785 = vand.u32 %v784, 4294901760
    %786 = vmatmul.mubr.f32.gmra.mrb[0].mxu0 %v785
    %v787 = vpop.f32.mrb[0].mxu0
    %v788 = vadd.f32 %v643, %v787
    %v789 = vpop.f32.mrb[0].mxu0
    %v790 = vand.u32 %v130, 4294901760
    %v791 = vsub.f32 %v130, %v790
    %v792 = vand.u32 %v791, 4294901760
    %793 = vmatprep.mubr.f32.mxu0 %v792
    %v794 = vand.u32 %v94, 4294901760
    %v795 = vsub.f32 %v94, %v794
    %v796 = vand.u32 %v795, 4294901760
    %797 = vmatmul.mubr.f32.gmra.mrb[0].mxu0 %v796
    %v798 = vpop.f32.mrb[0].mxu0
    %v799 = vadd.f32 %v652, %v798
    %v800 = vpop.f32.mrb[0].mxu0
    %v801 = vand.u32 %v133, 4294901760
    %v802 = vsub.f32 %v133, %v801
    %v803 = vand.u32 %v802, 4294901760
    %804 = vmatprep.mubr.f32.mxu0 %v803
    %v805 = vand.u32 %v96, 4294901760
    %v806 = vsub.f32 %v96, %v805
    %v807 = vand.u32 %v806, 4294901760
    %808 = vmatmul.mubr.f32.gmra.mrb[0].mxu0 %v807
    %v809 = vpop.f32.mrb[0].mxu0
    %v810 = vadd.f32 %v661, %v809
    %v811 = vpop.f32.mrb[0].mxu0
    %812 = vdwg.mxu0
    %813 = vmatprep.subr.mxu0 0.0
    %v814 = vand.u32 %v98, 4294901760
    %v815 = vsub.f32 %v98, %v814
    %v816 = vand.u32 %v815, 4294901760
    %817 = vmatpush1.msra.mxu0 %v816
    %818 = vmatprep.subr.mxu0 0.0
    %v819 = vand.u32 %v99, 4294901760
    %v820 = vsub.f32 %v99, %v819
    %v821 = vand.u32 %v820, 4294901760
    %822 = vmatpush1.msra.mxu0 %v821
    %823 = vmatprep.subr.mxu0 0.0
    %v824 = vand.u32 %v100, 4294901760
    %v825 = vsub.f32 %v100, %v824
    %v826 = vand.u32 %v825, 4294901760
    %827 = vmatpush1.msra.mxu0 %v826
    %828 = vmatprep.subr.mxu0 0.0
    %v829 = vand.u32 %v101, 4294901760
    %v830 = vsub.f32 %v101, %v829
    %v831 = vand.u32 %v830, 4294901760
    %832 = vmatpush1.msra.mxu0 %v831
    %833 = vmatprep.subr.mxu0 0.0
    %v834 = vand.u32 %v102, 4294901760
    %v835 = vsub.f32 %v102, %v834
    %v836 = vand.u32 %v835, 4294901760
    %837 = vmatpush1.msra.mxu0 %v836
    %838 = vmatprep.subr.mxu0 0.0
    %v839 = vand.u32 %v103, 4294901760
    %v840 = vsub.f32 %v103, %v839
    %v841 = vand.u32 %v840, 4294901760
    %842 = vmatpush1.msra.mxu0 %v841
    %843 = vmatprep.subr.mxu0 0.0
    %v844 = vand.u32 %v104, 4294901760
    %v845 = vsub.f32 %v104, %v844
    %v846 = vand.u32 %v845, 4294901760
    %847 = vmatpush1.msra.mxu0 %v846
    %848 = vmatprep.subr.mxu0 0.0
    %v849 = vand.u32 %v105, 4294901760
    %v850 = vsub.f32 %v105, %v849
    %v851 = vand.u32 %v850, 4294901760
    %852 = vmatpush1.msra.mxu0 %v851
    %853 = vmatprep.subr.mxu0 0.0
    %v854 = vand.u32 %v106, 4294901760
    %v855 = vsub.f32 %v106, %v854
    %v856 = vand.u32 %v855, 4294901760
    %857 = vmatpush1.msra.mxu0 %v856
    %858 = vmatprep.subr.mxu0 0.0
    %v859 = vand.u32 %v107, 4294901760
    %v860 = vsub.f32 %v107, %v859
    %v861 = vand.u32 %v860, 4294901760
    %862 = vmatpush1.msra.mxu0 %v861
    %863 = vmatprep.subr.mxu0 0.0
    %v864 = vand.u32 %v108, 4294901760
    %v865 = vsub.f32 %v108, %v864
    %v866 = vand.u32 %v865, 4294901760
    %867 = vmatpush1.msra.mxu0 %v866
    %868 = vmatprep.subr.mxu0 0.0
    %v869 = vand.u32 %v109, 4294901760
    %v870 = vsub.f32 %v109, %v869
    %v871 = vand.u32 %v870, 4294901760
    %872 = vmatpush1.msra.mxu0 %v871
    %873 = vmatprep.subr.mxu0 0.0
    %v874 = vand.u32 %v110, 4294901760
    %v875 = vsub.f32 %v110, %v874
    %v876 = vand.u32 %v875, 4294901760
    %877 = vmatpush1.msra.mxu0 %v876
    %878 = vmatprep.subr.mxu0 0.0
    %v879 = vand.u32 %v111, 4294901760
    %v880 = vsub.f32 %v111, %v879
    %v881 = vand.u32 %v880, 4294901760
    %882 = vmatpush1.msra.mxu0 %v881
    %883 = vmatprep.subr.mxu0 0.0
    %v884 = vand.u32 %v112, 4294901760
    %v885 = vsub.f32 %v112, %v884
    %v886 = vand.u32 %v885, 4294901760
    %887 = vmatpush1.msra.mxu0 %v886
    %888 = vmatprep.subr.mxu0 0.0
    %v889 = vand.u32 %v113, 4294901760
    %v890 = vsub.f32 %v113, %v889
    %v891 = vand.u32 %v890, 4294901760
    %892 = vmatpush1.msra.mxu0 %v891
    %893 = vmatprep.subr.mxu0 0.0
    %v894 = vand.u32 %v114, 4294901760
    %v895 = vsub.f32 %v114, %v894
    %v896 = vand.u32 %v895, 4294901760
    %897 = vmatpush1.msra.mxu0 %v896
    %898 = vmatprep.subr.mxu0 0.0
    %v899 = vand.u32 %v137, 4294901760
    %v900 = vsub.f32 %v137, %v899
    %v901 = vand.u32 %v900, 4294901760
    %902 = vmatpush1.msra.mxu0 %v901
    %903 = vmatprep.subr.mxu0 0.0
    %904 = vmatpush1.msra.mxu0 0.0
    %905 = vmatprep.subr.mxu0 0.0
    %906 = vmatpush1.msra.mxu0 0.0
    %907 = vmatprep.subr.mxu0 0.0
    %908 = vmatpush1.msra.mxu0 0.0
    %909 = vmatprep.subr.mxu0 0.0
    %910 = vmatpush1.msra.mxu0 0.0
    %911 = vmatprep.subr.mxu0 0.0
    %912 = vmatpush1.msra.mxu0 0.0
    %913 = vmatprep.subr.mxu0 0.0
    %914 = vmatpush1.msra.mxu0 0.0
    %915 = vmatprep.subr.mxu0 0.0
    %916 = vmatpush1.msra.mxu0 0.0
    %917 = vmatprep.subr.mxu0 0.0
    %918 = vmatpush1.msra.mxu0 0.0
    %919 = vmatprep.subr.mxu0 0.0
    %920 = vmatpush1.msra.mxu0 0.0
    %921 = vmatprep.subr.mxu0 0.0
    %922 = vmatpush1.msra.mxu0 0.0
    %923 = vmatprep.subr.mxu0 0.0
    %924 = vmatpush1.msra.mxu0 0.0
    %925 = vmatprep.subr.mxu0 0.0
    %926 = vmatpush1.msra.mxu0 0.0
    %927 = vmatprep.subr.mxu0 0.0
    %928 = vmatpush1.msra.mxu0 0.0
    %929 = vmatprep.subr.mxu0 0.0
    %930 = vmatpush1.msra.mxu0 0.0
    %v931 = vand.u32 %v118, 4294901760
    %932 = vmatprep.mubr.f32.mxu0 %v931
    %v933 = vand.u32 %v86, 4294901760
    %934 = vmatmul.mubr.f32.gmra.mrb[0].mxu0 %v933
    %v935 = vpop.f32.mrb[0].mxu0
    %v936 = vadd.f32 %v755, %v935
    %v937 = vpop.f32.mrb[0].mxu0
    %v938 = vand.u32 %v121, 4294901760
    %939 = vmatprep.mubr.f32.mxu0 %v938
    %v940 = vand.u32 %v88, 4294901760
    %941 = vmatmul.mubr.f32.gmra.mrb[0].mxu0 %v940
    %v942 = vpop.f32.mrb[0].mxu0
    %v943 = vadd.f32 %v766, %v942
    %v944 = vpop.f32.mrb[0].mxu0
    %v945 = vand.u32 %v124, 4294901760
    %946 = vmatprep.mubr.f32.mxu0 %v945
    %v947 = vand.u32 %v90, 4294901760
    %948 = vmatmul.mubr.f32.gmra.mrb[0].mxu0 %v947
    %v949 = vpop.f32.mrb[0].mxu0
    %v950 = vadd.f32 %v777, %v949
    %v951 = vpop.f32.mrb[0].mxu0
    %v952 = vand.u32 %v127, 4294901760
    %953 = vmatprep.mubr.f32.mxu0 %v952
    %v954 = vand.u32 %v92, 4294901760
    %955 = vmatmul.mubr.f32.gmra.mrb[0].mxu0 %v954
    %v956 = vpop.f32.mrb[0].mxu0
    %v957 = vadd.f32 %v788, %v956
    %v958 = vpop.f32.mrb[0].mxu0
    %v959 = vand.u32 %v130, 4294901760
    %960 = vmatprep.mubr.f32.mxu0 %v959
    %v961 = vand.u32 %v94, 4294901760
    %962 = vmatmul.mubr.f32.gmra.mrb[0].mxu0 %v961
    %v963 = vpop.f32.mrb[0].mxu0
    %v964 = vadd.f32 %v799, %v963
    %v965 = vpop.f32.mrb[0].mxu0
    %v966 = vand.u32 %v133, 4294901760
    %967 = vmatprep.mubr.f32.mxu0 %v966
    %v968 = vand.u32 %v96, 4294901760
    %969 = vmatmul.mubr.f32.gmra.mrb[0].mxu0 %v968
    %v970 = vpop.f32.mrb[0].mxu0
    %v971 = vadd.f32 %v810, %v970
    %v972 = vpop.f32.mrb[0].mxu0
    %973 = vdwg.mxu0
    %974 = vmatprep.subr.mxu0 0.0
    %v975 = vand.u32 %v98, 4294901760
    %976 = vmatpush1.msra.mxu0 %v975
    %977 = vmatprep.subr.mxu0 0.0
    %v978 = vand.u32 %v99, 4294901760
    %979 = vmatpush1.msra.mxu0 %v978
    %980 = vmatprep.subr.mxu0 0.0
    %v981 = vand.u32 %v100, 4294901760
    %982 = vmatpush1.msra.mxu0 %v981
    %983 = vmatprep.subr.mxu0 0.0
    %v984 = vand.u32 %v101, 4294901760
    %985 = vmatpush1.msra.mxu0 %v984
    %986 = vmatprep.subr.mxu0 0.0
    %v987 = vand.u32 %v102, 4294901760
    %988 = vmatpush1.msra.mxu0 %v987
    %989 = vmatprep.subr.mxu0 0.0
    %v990 = vand.u32 %v103, 4294901760
    %991 = vmatpush1.msra.mxu0 %v990
    %992 = vmatprep.subr.mxu0 0.0
    %v993 = vand.u32 %v104, 4294901760
    %994 = vmatpush1.msra.mxu0 %v993
    %995 = vmatprep.subr.mxu0 0.0
    %v996 = vand.u32 %v105, 4294901760
    %997 = vmatpush1.msra.mxu0 %v996
    %998 = vmatprep.subr.mxu0 0.0
    %v999 = vand.u32 %v106, 4294901760
    %1000 = vmatpush1.msra.mxu0 %v999
    %1001 = vmatprep.subr.mxu0 0.0
    %v1002 = vand.u32 %v107, 4294901760
    %1003 = vmatpush1.msra.mxu0 %v1002
    %1004 = vmatprep.subr.mxu0 0.0
    %v1005 = vand.u32 %v108, 4294901760
    %1006 = vmatpush1.msra.mxu0 %v1005
    %1007 = vmatprep.subr.mxu0 0.0
    %v1008 = vand.u32 %v109, 4294901760
    %1009 = vmatpush1.msra.mxu0 %v1008
    %1010 = vmatprep.subr.mxu0 0.0
    %v1011 = vand.u32 %v110, 4294901760
    %1012 = vmatpush1.msra.mxu0 %v1011
    %1013 = vmatprep.subr.mxu0 0.0
    %v1014 = vand.u32 %v111, 4294901760
    %1015 = vmatpush1.msra.mxu0 %v1014
    %1016 = vmatprep.subr.mxu0 0.0
    %v1017 = vand.u32 %v112, 4294901760
    %1018 = vmatpush1.msra.mxu0 %v1017
    %1019 = vmatprep.subr.mxu0 0.0
    %v1020 = vand.u32 %v113, 4294901760
    %1021 = vmatpush1.msra.mxu0 %v1020
    %1022 = vmatprep.subr.mxu0 0.0
    %v1023 = vand.u32 %v114, 4294901760
    %1024 = vmatpush1.msra.mxu0 %v1023
    %1025 = vmatprep.subr.mxu0 0.0
    %v1026 = vand.u32 %v137, 4294901760
    %1027 = vmatpush1.msra.mxu0 %v1026
    %1028 = vmatprep.subr.mxu0 0.0
    %1029 = vmatpush1.msra.mxu0 0.0
    %1030 = vmatprep.subr.mxu0 0.0
    %1031 = vmatpush1.msra.mxu0 0.0
    %1032 = vmatprep.subr.mxu0 0.0
    %1033 = vmatpush1.msra.mxu0 0.0
    %1034 = vmatprep.subr.mxu0 0.0
    %1035 = vmatpush1.msra.mxu0 0.0
    %1036 = vmatprep.subr.mxu0 0.0
    %1037 = vmatpush1.msra.mxu0 0.0
    %1038 = vmatprep.subr.mxu0 0.0
    %1039 = vmatpush1.msra.mxu0 0.0
    %1040 = vmatprep.subr.mxu0 0.0
    %1041 = vmatpush1.msra.mxu0 0.0
    %1042 = vmatprep.subr.mxu0 0.0
    %1043 = vmatpush1.msra.mxu0 0.0
    %1044 = vmatprep.subr.mxu0 0.0
    %1045 = vmatpush1.msra.mxu0 0.0
    %1046 = vmatprep.subr.mxu0 0.0
    %1047 = vmatpush1.msra.mxu0 0.0
    %1048 = vmatprep.subr.mxu0 0.0
    %1049 = vmatpush1.msra.mxu0 0.0
    %1050 = vmatprep.subr.mxu0 0.0
    %1051 = vmatpush1.msra.mxu0 0.0
    %1052 = vmatprep.subr.mxu0 0.0
    %1053 = vmatpush1.msra.mxu0 0.0
    %1054 = vmatprep.subr.mxu0 0.0
    %1055 = vmatpush1.msra.mxu0 0.0
    %v1056 = vand.u32 %v118, 4294901760
    %1057 = vmatprep.mubr.f32.mxu0 %v1056
    %v1058 = vand.u32 %v86, 4294901760
    %1059 = vmatmul.mubr.f32.gmra.mrb[0].mxu0 %v1058
    %v1060 = vpop.f32.mrb[0].mxu0
    %v1061 = vadd.f32 %v936, %v1060
    %v1062 = vpop.f32.mrb[0].mxu0
    %v1063 = vand.u32 %v121, 4294901760
    %1064 = vmatprep.mubr.f32.mxu0 %v1063
    %v1065 = vand.u32 %v88, 4294901760
    %1066 = vmatmul.mubr.f32.gmra.mrb[0].mxu0 %v1065
    %v1067 = vpop.f32.mrb[0].mxu0
    %v1068 = vadd.f32 %v943, %v1067
    %v1069 = vpop.f32.mrb[0].mxu0
    %v1070 = vand.u32 %v124, 4294901760
    %1071 = vmatprep.mubr.f32.mxu0 %v1070
    %v1072 = vand.u32 %v90, 4294901760
    %1073 = vmatmul.mubr.f32.gmra.mrb[0].mxu0 %v1072
    %v1074 = vpop.f32.mrb[0].mxu0
    %v1075 = vadd.f32 %v950, %v1074
    %v1076 = vpop.f32.mrb[0].mxu0
    %v1077 = vand.u32 %v127, 4294901760
    %1078 = vmatprep.mubr.f32.mxu0 %v1077
    %v1079 = vand.u32 %v92, 4294901760
    %1080 = vmatmul.mubr.f32.gmra.mrb[0].mxu0 %v1079
    %v1081 = vpop.f32.mrb[0].mxu0
    %v1082 = vadd.f32 %v957, %v1081
    %v1083 = vpop.f32.mrb[0].mxu0
    %v1084 = vand.u32 %v130, 4294901760
    %1085 = vmatprep.mubr.f32.mxu0 %v1084
    %v1086 = vand.u32 %v94, 4294901760
    %1087 = vmatmul.mubr.f32.gmra.mrb[0].mxu0 %v1086
    %v1088 = vpop.f32.mrb[0].mxu0
    %v1089 = vadd.f32 %v964, %v1088
    %v1090 = vpop.f32.mrb[0].mxu0
    %v1091 = vand.u32 %v133, 4294901760
    %1092 = vmatprep.mubr.f32.mxu0 %v1091
    %v1093 = vand.u32 %v96, 4294901760
    %1094 = vmatmul.mubr.f32.gmra.mrb[0].mxu0 %v1093
    %v1095 = vpop.f32.mrb[0].mxu0
    %v1096 = vadd.f32 %v971, %v1095
    %v1097 = vpop.f32.mrb[0].mxu0
    %1098 = vdwg.mxu0
    %v1099 = vld [vmem:[%s2] sm:$0x1]
    %v1100 = vld [vmem:[%s2 + $0x1] sm:$0x1]
    %v1101 = vadd.f32 %v1061, %v1075
    %v1102 = vadd.f32 %v1068, %v1082
    %v1103 = vadd.f32 %v1101, %v1089
    %v1104 = vadd.f32 %v1102, %v1096
    %v1105 = vlaneseq
    %v1106 = vshrl.u32 %v1105, 7
    %v1107 = vsub.s32 0, %v1106
    %v1108 = vrot.slane %v1099, %v1107
    %v1109 = vadd.f32 %v1103, %v1108
    %v1110 = vadd.f32 %v1104, %v1108
    %v1111 = vtanh.pop %v1109
    %v1112 = vtanh.pop %v1110
    %v1113 = vlaneseq
    %v1114 = vshrl.u32 %v1113, 7
    %v1115 = vsub.s32 0, %v1114
    %v1116 = vrot.slane %v1100, %v1115
    %v1117 = vmul.f32 %v1111, %v1116
    %v1118 = vmul.f32 %v1112, %v1116
    %1119 = vadd.xlane.f32.xlu0 %v1117
    %v1120 = vpop.xlane.xlu0 %1119
    %1121 = vadd.xlane.f32.xlu0 %v1118
    %v1122 = vpop.xlane.xlu0 %1121
    %v1123 = vld [vmem:[%s3] sm:$0x3]
    %vm1124 = vcmp.gt.f32.partialorder %v1123, 0.0
    %v1127 = vlaneseq
    %v1128 = vshrl.u32 %v1127, 7
    %v1129 = vsub.s32 %v36, %v1128
    %v1130 = vrot.slane %v1120, %v1129
    %v1131 = vlaneseq
    %v1132 = vshrl.u32 %v1131, 7
    %v1133 = vsub.s32 %v36, %v1132
    %v1134 = vrot.slane %v1122, %v1133
    %vm1135 = vcmask 1041409
    %v1136 = vsel %vm1135, %v1134, %v1130
    %v1138 = vsel %vm1124, %v1136, -1e+30
    %vm1139 = vcmask 58368
    %v1140 = vsel %vm1139, %v1138, -inf
    %1141 = vmax.xlane.f32.xlu0 %v1140
    %v1142 = vpop.xlane.xlu0 %1141
    %v1143 = vsub.f32 %v1138, %v1142
    %v1144 = vmul.f32 %v1143, 1.442695
    %v1145 = vpow.pop %v1144
    %v1146 = vsel %vm1139, %v1145, 0.0
    %1147 = vadd.xlane.f32.xlu0 %v1146
    %v1148 = vpop.xlane.xlu0 %1147
    %v1149 = vrcp.pop %v1148
    %v1150 = vmul.f32 %v1145, %v1149
    %1151 = vst.msk [vmem:[#allocation6] sm:$0x3] %vm1139, %v1150
    %v1154 = vunpack.c.l.s4 1966171168
    %v1155 = vunpack.c.0.s8 %v1154
    %v1156 = vlaneseq
    %v1157 = vshrl.u32 %v1156, 7
    %v1158 = vsub.s32 %v1155, %v1157
    %v1159 = vrot.slane %v1150, %v1158
    %v1160 = vcombine.high %v1159, %v1159
    %v1162 = vunpack.c.l.s4 1966171168
    %v1163 = vunpack.c.0.s8 %v1162
    %v1164 = vlaneseq
    %v1165 = vshrl.u32 %v1164, 7
    %v1166 = vsub.s32 %v1163, %v1165
    %v1167 = vrot.slane %v1159, %v1166
    %v1169 = vunpack.c.l.s4 1966171168
    %v1170 = vunpack.c.0.s8 %v1169
    %v1171 = vlaneseq
    %v1172 = vshrl.u32 %v1171, 7
    %v1173 = vsub.s32 %v1170, %v1172
    %v1174 = vrot.slane %v1160, %v1173
    %vm1175 = vcmask 64512
    %v1176 = vsel %vm1175, %v1167, 0
    %1178 = vmatprep.subr.mxu0 0.0
    %v1179 = vand.u32 %v1111, 4294901760
    %1180 = vmatpush1.msra.mxu0 %v1179
    %1181 = vmatprep.subr.mxu0 0.0
    %1182 = vmatpush1.msra.mxu0 0.0
    %1183 = vmatprep.subr.mxu0 0.0
    %1184 = vmatpush1.msra.mxu0 0.0
    %1185 = vmatprep.subr.mxu0 0.0
    %1186 = vmatpush1.msra.mxu0 0.0
    %1187 = vmatprep.subr.mxu0 0.0
    %1188 = vmatpush1.msra.mxu0 0.0
    %1189 = vmatprep.subr.mxu0 0.0
    %1190 = vmatpush1.msra.mxu0 0.0
    %1191 = vmatprep.subr.mxu0 0.0
    %1192 = vmatpush1.msra.mxu0 0.0
    %1193 = vmatprep.subr.mxu0 0.0
    %1194 = vmatpush1.msra.mxu0 0.0
    %1195 = vmatprep.subr.mxu0 0.0
    %1196 = vmatpush1.msra.mxu0 0.0
    %1197 = vmatprep.subr.mxu0 0.0
    %1198 = vmatpush1.msra.mxu0 0.0
    %1199 = vmatprep.subr.mxu0 0.0
    %1200 = vmatpush1.msra.mxu0 0.0
    %1201 = vmatprep.subr.mxu0 0.0
    %1202 = vmatpush1.msra.mxu0 0.0
    %1203 = vmatprep.subr.mxu0 0.0
    %1204 = vmatpush1.msra.mxu0 0.0
    %1205 = vmatprep.subr.mxu0 0.0
    %1206 = vmatpush1.msra.mxu0 0.0
    %1207 = vmatprep.subr.mxu0 0.0
    %1208 = vmatpush1.msra.mxu0 0.0
    %1209 = vmatprep.subr.mxu0 0.0
    %1210 = vmatpush1.msra.mxu0 0.0
    %1211 = vmatprep.subr.mxu0 0.0
    %1212 = vmatpush1.msra.mxu0 0.0
    %1213 = vmatprep.subr.mxu0 0.0
    %1214 = vmatpush1.msra.mxu0 0.0
    %1215 = vmatprep.subr.mxu0 0.0
    %1216 = vmatpush1.msra.mxu0 0.0
    %1217 = vmatprep.subr.mxu0 0.0
    %1218 = vmatpush1.msra.mxu0 0.0
    %1219 = vmatprep.subr.mxu0 0.0
    %1220 = vmatpush1.msra.mxu0 0.0
    %1221 = vmatprep.subr.mxu0 0.0
    %1222 = vmatpush1.msra.mxu0 0.0
    %1223 = vmatprep.subr.mxu0 0.0
    %1224 = vmatpush1.msra.mxu0 0.0
    %1225 = vmatprep.subr.mxu0 0.0
    %1226 = vmatpush1.msra.mxu0 0.0
    %1227 = vmatprep.subr.mxu0 0.0
    %1228 = vmatpush1.msra.mxu0 0.0
    %1229 = vmatprep.subr.mxu0 0.0
    %1230 = vmatpush1.msra.mxu0 0.0
    %1231 = vmatprep.subr.mxu0 0.0
    %1232 = vmatpush1.msra.mxu0 0.0
    %1233 = vmatprep.subr.mxu0 0.0
    %1234 = vmatpush1.msra.mxu0 0.0
    %1235 = vmatprep.subr.mxu0 0.0
    %1236 = vmatpush1.msra.mxu0 0.0
    %1237 = vmatprep.subr.mxu0 0.0
    %1238 = vmatpush1.msra.mxu0 0.0
    %1239 = vmatprep.subr.mxu0 0.0
    %1240 = vmatpush1.msra.mxu0 0.0
    %1241 = vmatprep.subr.mxu0 0.0
    %1242 = vmatpush1.msra.mxu0 0.0
    %1243 = vmatprep.mubr.f32.mxu0 0.0
    %v1244 = vand.u32 %v1176, 4294901760
    %v1245 = vsub.f32 %v1176, %v1244
    %v1246 = vand.u32 %v1245, 4294901760
    %v1247 = vsub.f32 %v1245, %v1246
    %v1248 = vand.u32 %v1247, 4294901760
    %1249 = vmatmul.mubr.f32.gmra.mrb[0].mxu0 %v1248
    %v1250 = vpop.f32.mrb[0].mxu0
    %v1251 = vadd.f32 0.0, %v1250
    %v1252 = vpop.f32.mrb[0].mxu0
    %1253 = vdwg.mxu0
    %1254 = vmatprep.subr.mxu0 0.0
    %v1255 = vand.u32 %v1111, 4294901760
    %v1256 = vsub.f32 %v1111, %v1255
    %v1257 = vand.u32 %v1256, 4294901760
    %v1258 = vsub.f32 %v1256, %v1257
    %v1259 = vand.u32 %v1258, 4294901760
    %1260 = vmatpush1.msra.mxu0 %v1259
    %1261 = vmatprep.subr.mxu0 0.0
    %1262 = vmatpush1.msra.mxu0 0.0
    %1263 = vmatprep.subr.mxu0 0.0
    %1264 = vmatpush1.msra.mxu0 0.0
    %1265 = vmatprep.subr.mxu0 0.0
    %1266 = vmatpush1.msra.mxu0 0.0
    %1267 = vmatprep.subr.mxu0 0.0
    %1268 = vmatpush1.msra.mxu0 0.0
    %1269 = vmatprep.subr.mxu0 0.0
    %1270 = vmatpush1.msra.mxu0 0.0
    %1271 = vmatprep.subr.mxu0 0.0
    %1272 = vmatpush1.msra.mxu0 0.0
    %1273 = vmatprep.subr.mxu0 0.0
    %1274 = vmatpush1.msra.mxu0 0.0
    %1275 = vmatprep.subr.mxu0 0.0
    %1276 = vmatpush1.msra.mxu0 0.0
    %1277 = vmatprep.subr.mxu0 0.0
    %1278 = vmatpush1.msra.mxu0 0.0
    %1279 = vmatprep.subr.mxu0 0.0
    %1280 = vmatpush1.msra.mxu0 0.0
    %1281 = vmatprep.subr.mxu0 0.0
    %1282 = vmatpush1.msra.mxu0 0.0
    %1283 = vmatprep.subr.mxu0 0.0
    %1284 = vmatpush1.msra.mxu0 0.0
    %1285 = vmatprep.subr.mxu0 0.0
    %1286 = vmatpush1.msra.mxu0 0.0
    %1287 = vmatprep.subr.mxu0 0.0
    %1288 = vmatpush1.msra.mxu0 0.0
    %1289 = vmatprep.subr.mxu0 0.0
    %1290 = vmatpush1.msra.mxu0 0.0
    %1291 = vmatprep.subr.mxu0 0.0
    %1292 = vmatpush1.msra.mxu0 0.0
    %1293 = vmatprep.subr.mxu0 0.0
    %1294 = vmatpush1.msra.mxu0 0.0
    %1295 = vmatprep.subr.mxu0 0.0
    %1296 = vmatpush1.msra.mxu0 0.0
    %1297 = vmatprep.subr.mxu0 0.0
    %1298 = vmatpush1.msra.mxu0 0.0
    %1299 = vmatprep.subr.mxu0 0.0
    %1300 = vmatpush1.msra.mxu0 0.0
    %1301 = vmatprep.subr.mxu0 0.0
    %1302 = vmatpush1.msra.mxu0 0.0
    %1303 = vmatprep.subr.mxu0 0.0
    %1304 = vmatpush1.msra.mxu0 0.0
    %1305 = vmatprep.subr.mxu0 0.0
    %1306 = vmatpush1.msra.mxu0 0.0
    %1307 = vmatprep.subr.mxu0 0.0
    %1308 = vmatpush1.msra.mxu0 0.0
    %1309 = vmatprep.subr.mxu0 0.0
    %1310 = vmatpush1.msra.mxu0 0.0
    %1311 = vmatprep.subr.mxu0 0.0
    %1312 = vmatpush1.msra.mxu0 0.0
    %1313 = vmatprep.subr.mxu0 0.0
    %1314 = vmatpush1.msra.mxu0 0.0
    %1315 = vmatprep.subr.mxu0 0.0
    %1316 = vmatpush1.msra.mxu0 0.0
    %1317 = vmatprep.subr.mxu0 0.0
    %1318 = vmatpush1.msra.mxu0 0.0
    %1319 = vmatprep.subr.mxu0 0.0
    %1320 = vmatpush1.msra.mxu0 0.0
    %1321 = vmatprep.subr.mxu0 0.0
    %1322 = vmatpush1.msra.mxu0 0.0
    %1323 = vmatprep.mubr.f32.mxu0 0.0
    %v1324 = vand.u32 %v1176, 4294901760
    %1325 = vmatmul.mubr.f32.gmra.mrb[0].mxu0 %v1324
    %v1326 = vpop.f32.mrb[0].mxu0
    %v1327 = vadd.f32 %v1251, %v1326
    %v1328 = vpop.f32.mrb[0].mxu0
    %1329 = vdwg.mxu0
    %1330 = vmatprep.subr.mxu0 0.0
    %v1331 = vand.u32 %v1111, 4294901760
    %v1332 = vsub.f32 %v1111, %v1331
    %1333 = vmatpush1.msra.mxu0 %v1332
    %1334 = vmatprep.subr.mxu0 0.0
    %1335 = vmatpush1.msra.mxu0 0.0
    %1336 = vmatprep.subr.mxu0 0.0
    %1337 = vmatpush1.msra.mxu0 0.0
    %1338 = vmatprep.subr.mxu0 0.0
    %1339 = vmatpush1.msra.mxu0 0.0
    %1340 = vmatprep.subr.mxu0 0.0
    %1341 = vmatpush1.msra.mxu0 0.0
    %1342 = vmatprep.subr.mxu0 0.0
    %1343 = vmatpush1.msra.mxu0 0.0
    %1344 = vmatprep.subr.mxu0 0.0
    %1345 = vmatpush1.msra.mxu0 0.0
    %1346 = vmatprep.subr.mxu0 0.0
    %1347 = vmatpush1.msra.mxu0 0.0
    %1348 = vmatprep.subr.mxu0 0.0
    %1349 = vmatpush1.msra.mxu0 0.0
    %1350 = vmatprep.subr.mxu0 0.0
    %1351 = vmatpush1.msra.mxu0 0.0
    %1352 = vmatprep.subr.mxu0 0.0
    %1353 = vmatpush1.msra.mxu0 0.0
    %1354 = vmatprep.subr.mxu0 0.0
    %1355 = vmatpush1.msra.mxu0 0.0
    %1356 = vmatprep.subr.mxu0 0.0
    %1357 = vmatpush1.msra.mxu0 0.0
    %1358 = vmatprep.subr.mxu0 0.0
    %1359 = vmatpush1.msra.mxu0 0.0
    %1360 = vmatprep.subr.mxu0 0.0
    %1361 = vmatpush1.msra.mxu0 0.0
    %1362 = vmatprep.subr.mxu0 0.0
    %1363 = vmatpush1.msra.mxu0 0.0
    %1364 = vmatprep.subr.mxu0 0.0
    %1365 = vmatpush1.msra.mxu0 0.0
    %1366 = vmatprep.subr.mxu0 0.0
    %1367 = vmatpush1.msra.mxu0 0.0
    %1368 = vmatprep.subr.mxu0 0.0
    %1369 = vmatpush1.msra.mxu0 0.0
    %1370 = vmatprep.subr.mxu0 0.0
    %1371 = vmatpush1.msra.mxu0 0.0
    %1372 = vmatprep.subr.mxu0 0.0
    %1373 = vmatpush1.msra.mxu0 0.0
    %1374 = vmatprep.subr.mxu0 0.0
    %1375 = vmatpush1.msra.mxu0 0.0
    %1376 = vmatprep.subr.mxu0 0.0
    %1377 = vmatpush1.msra.mxu0 0.0
    %1378 = vmatprep.subr.mxu0 0.0
    %1379 = vmatpush1.msra.mxu0 0.0
    %1380 = vmatprep.subr.mxu0 0.0
    %1381 = vmatpush1.msra.mxu0 0.0
    %1382 = vmatprep.subr.mxu0 0.0
    %1383 = vmatpush1.msra.mxu0 0.0
    %1384 = vmatprep.subr.mxu0 0.0
    %1385 = vmatpush1.msra.mxu0 0.0
    %1386 = vmatprep.subr.mxu0 0.0
    %1387 = vmatpush1.msra.mxu0 0.0
    %1388 = vmatprep.subr.mxu0 0.0
    %1389 = vmatpush1.msra.mxu0 0.0
    %1390 = vmatprep.subr.mxu0 0.0
    %1391 = vmatpush1.msra.mxu0 0.0
    %1392 = vmatprep.subr.mxu0 0.0
    %1393 = vmatpush1.msra.mxu0 0.0
    %1394 = vmatprep.subr.mxu0 0.0
    %1395 = vmatpush1.msra.mxu0 0.0
    %1396 = vmatprep.mubr.f32.mxu0 0.0
    %v1397 = vand.u32 %v1176, 4294901760
    %v1398 = vsub.f32 %v1176, %v1397
    %1399 = vmatmul.mubr.f32.gmra.mrb[0].mxu0 %v1398
    %v1400 = vpop.f32.mrb[0].mxu0
    %v1401 = vadd.f32 %v1327, %v1400
    %v1402 = vpop.f32.mrb[0].mxu0
    %1403 = vdwg.mxu0
    %1404 = vmatprep.subr.mxu0 0.0
    %v1405 = vand.u32 %v1111, 4294901760
    %1406 = vmatpush1.msra.mxu0 %v1405
    %1407 = vmatprep.subr.mxu0 0.0
    %1408 = vmatpush1.msra.mxu0 0.0
    %1409 = vmatprep.subr.mxu0 0.0
    %1410 = vmatpush1.msra.mxu0 0.0
    %1411 = vmatprep.subr.mxu0 0.0
    %1412 = vmatpush1.msra.mxu0 0.0
    %1413 = vmatprep.subr.mxu0 0.0
    %1414 = vmatpush1.msra.mxu0 0.0
    %1415 = vmatprep.subr.mxu0 0.0
    %1416 = vmatpush1.msra.mxu0 0.0
    %1417 = vmatprep.subr.mxu0 0.0
    %1418 = vmatpush1.msra.mxu0 0.0
    %1419 = vmatprep.subr.mxu0 0.0
    %1420 = vmatpush1.msra.mxu0 0.0
    %1421 = vmatprep.subr.mxu0 0.0
    %1422 = vmatpush1.msra.mxu0 0.0
    %1423 = vmatprep.subr.mxu0 0.0
    %1424 = vmatpush1.msra.mxu0 0.0
    %1425 = vmatprep.subr.mxu0 0.0
    %1426 = vmatpush1.msra.mxu0 0.0
    %1427 = vmatprep.subr.mxu0 0.0
    %1428 = vmatpush1.msra.mxu0 0.0
    %1429 = vmatprep.subr.mxu0 0.0
    %1430 = vmatpush1.msra.mxu0 0.0
    %1431 = vmatprep.subr.mxu0 0.0
    %1432 = vmatpush1.msra.mxu0 0.0
    %1433 = vmatprep.subr.mxu0 0.0
    %1434 = vmatpush1.msra.mxu0 0.0
    %1435 = vmatprep.subr.mxu0 0.0
    %1436 = vmatpush1.msra.mxu0 0.0
    %1437 = vmatprep.subr.mxu0 0.0
    %1438 = vmatpush1.msra.mxu0 0.0
    %1439 = vmatprep.subr.mxu0 0.0
    %1440 = vmatpush1.msra.mxu0 0.0
    %1441 = vmatprep.subr.mxu0 0.0
    %1442 = vmatpush1.msra.mxu0 0.0
    %1443 = vmatprep.subr.mxu0 0.0
    %1444 = vmatpush1.msra.mxu0 0.0
    %1445 = vmatprep.subr.mxu0 0.0
    %1446 = vmatpush1.msra.mxu0 0.0
    %1447 = vmatprep.subr.mxu0 0.0
    %1448 = vmatpush1.msra.mxu0 0.0
    %1449 = vmatprep.subr.mxu0 0.0
    %1450 = vmatpush1.msra.mxu0 0.0
    %1451 = vmatprep.subr.mxu0 0.0
    %1452 = vmatpush1.msra.mxu0 0.0
    %1453 = vmatprep.subr.mxu0 0.0
    %1454 = vmatpush1.msra.mxu0 0.0
    %1455 = vmatprep.subr.mxu0 0.0
    %1456 = vmatpush1.msra.mxu0 0.0
    %1457 = vmatprep.subr.mxu0 0.0
    %1458 = vmatpush1.msra.mxu0 0.0
    %1459 = vmatprep.subr.mxu0 0.0
    %1460 = vmatpush1.msra.mxu0 0.0
    %1461 = vmatprep.subr.mxu0 0.0
    %1462 = vmatpush1.msra.mxu0 0.0
    %1463 = vmatprep.subr.mxu0 0.0
    %1464 = vmatpush1.msra.mxu0 0.0
    %1465 = vmatprep.subr.mxu0 0.0
    %1466 = vmatpush1.msra.mxu0 0.0
    %1467 = vmatprep.subr.mxu0 0.0
    %1468 = vmatpush1.msra.mxu0 0.0
    %1469 = vmatprep.mubr.f32.mxu0 0.0
    %v1470 = vand.u32 %v1176, 4294901760
    %v1471 = vsub.f32 %v1176, %v1470
    %v1472 = vand.u32 %v1471, 4294901760
    %1473 = vmatmul.mubr.f32.gmra.mrb[0].mxu0 %v1472
    %v1474 = vpop.f32.mrb[0].mxu0
    %v1475 = vadd.f32 %v1401, %v1474
    %v1476 = vpop.f32.mrb[0].mxu0
    %1477 = vdwg.mxu0
    %1478 = vmatprep.subr.mxu0 0.0
    %v1479 = vand.u32 %v1111, 4294901760
    %v1480 = vsub.f32 %v1111, %v1479
    %v1481 = vand.u32 %v1480, 4294901760
    %1482 = vmatpush1.msra.mxu0 %v1481
    %1483 = vmatprep.subr.mxu0 0.0
    %1484 = vmatpush1.msra.mxu0 0.0
    %1485 = vmatprep.subr.mxu0 0.0
    %1486 = vmatpush1.msra.mxu0 0.0
    %1487 = vmatprep.subr.mxu0 0.0
    %1488 = vmatpush1.msra.mxu0 0.0
    %1489 = vmatprep.subr.mxu0 0.0
    %1490 = vmatpush1.msra.mxu0 0.0
    %1491 = vmatprep.subr.mxu0 0.0
    %1492 = vmatpush1.msra.mxu0 0.0
    %1493 = vmatprep.subr.mxu0 0.0
    %1494 = vmatpush1.msra.mxu0 0.0
    %1495 = vmatprep.subr.mxu0 0.0
    %1496 = vmatpush1.msra.mxu0 0.0
    %1497 = vmatprep.subr.mxu0 0.0
    %1498 = vmatpush1.msra.mxu0 0.0
    %1499 = vmatprep.subr.mxu0 0.0
    %1500 = vmatpush1.msra.mxu0 0.0
    %1501 = vmatprep.subr.mxu0 0.0
    %1502 = vmatpush1.msra.mxu0 0.0
    %1503 = vmatprep.subr.mxu0 0.0
    %1504 = vmatpush1.msra.mxu0 0.0
    %1505 = vmatprep.subr.mxu0 0.0
    %1506 = vmatpush1.msra.mxu0 0.0
    %1507 = vmatprep.subr.mxu0 0.0
    %1508 = vmatpush1.msra.mxu0 0.0
    %1509 = vmatprep.subr.mxu0 0.0
    %1510 = vmatpush1.msra.mxu0 0.0
    %1511 = vmatprep.subr.mxu0 0.0
    %1512 = vmatpush1.msra.mxu0 0.0
    %1513 = vmatprep.subr.mxu0 0.0
    %1514 = vmatpush1.msra.mxu0 0.0
    %1515 = vmatprep.subr.mxu0 0.0
    %1516 = vmatpush1.msra.mxu0 0.0
    %1517 = vmatprep.subr.mxu0 0.0
    %1518 = vmatpush1.msra.mxu0 0.0
    %1519 = vmatprep.subr.mxu0 0.0
    %1520 = vmatpush1.msra.mxu0 0.0
    %1521 = vmatprep.subr.mxu0 0.0
    %1522 = vmatpush1.msra.mxu0 0.0
    %1523 = vmatprep.subr.mxu0 0.0
    %1524 = vmatpush1.msra.mxu0 0.0
    %1525 = vmatprep.subr.mxu0 0.0
    %1526 = vmatpush1.msra.mxu0 0.0
    %1527 = vmatprep.subr.mxu0 0.0
    %1528 = vmatpush1.msra.mxu0 0.0
    %1529 = vmatprep.subr.mxu0 0.0
    %1530 = vmatpush1.msra.mxu0 0.0
    %1531 = vmatprep.subr.mxu0 0.0
    %1532 = vmatpush1.msra.mxu0 0.0
    %1533 = vmatprep.subr.mxu0 0.0
    %1534 = vmatpush1.msra.mxu0 0.0
    %1535 = vmatprep.subr.mxu0 0.0
    %1536 = vmatpush1.msra.mxu0 0.0
    %1537 = vmatprep.subr.mxu0 0.0
    %1538 = vmatpush1.msra.mxu0 0.0
    %1539 = vmatprep.subr.mxu0 0.0
    %1540 = vmatpush1.msra.mxu0 0.0
    %1541 = vmatprep.subr.mxu0 0.0
    %1542 = vmatpush1.msra.mxu0 0.0
    %1543 = vmatprep.subr.mxu0 0.0
    %1544 = vmatpush1.msra.mxu0 0.0
    %1545 = vmatprep.mubr.f32.mxu0 0.0
    %v1546 = vand.u32 %v1176, 4294901760
    %1547 = vmatmul.mubr.f32.gmra.mrb[0].mxu0 %v1546
    %v1548 = vpop.f32.mrb[0].mxu0
    %v1549 = vadd.f32 %v1475, %v1548
    %v1550 = vpop.f32.mrb[0].mxu0
    %1551 = vdwg.mxu0
    %1552 = vmatprep.subr.mxu0 0.0
    %v1553 = vand.u32 %v1111, 4294901760
    %1554 = vmatpush1.msra.mxu0 %v1553
    %1555 = vmatprep.subr.mxu0 0.0
    %1556 = vmatpush1.msra.mxu0 0.0
    %1557 = vmatprep.subr.mxu0 0.0
    %1558 = vmatpush1.msra.mxu0 0.0
    %1559 = vmatprep.subr.mxu0 0.0
    %1560 = vmatpush1.msra.mxu0 0.0
    %1561 = vmatprep.subr.mxu0 0.0
    %1562 = vmatpush1.msra.mxu0 0.0
    %1563 = vmatprep.subr.mxu0 0.0
    %1564 = vmatpush1.msra.mxu0 0.0
    %1565 = vmatprep.subr.mxu0 0.0
    %1566 = vmatpush1.msra.mxu0 0.0
    %1567 = vmatprep.subr.mxu0 0.0
    %1568 = vmatpush1.msra.mxu0 0.0
    %1569 = vmatprep.subr.mxu0 0.0
    %1570 = vmatpush1.msra.mxu0 0.0
    %1571 = vmatprep.subr.mxu0 0.0
    %1572 = vmatpush1.msra.mxu0 0.0
    %1573 = vmatprep.subr.mxu0 0.0
    %1574 = vmatpush1.msra.mxu0 0.0
    %1575 = vmatprep.subr.mxu0 0.0
    %1576 = vmatpush1.msra.mxu0 0.0
    %1577 = vmatprep.subr.mxu0 0.0
    %1578 = vmatpush1.msra.mxu0 0.0
    %1579 = vmatprep.subr.mxu0 0.0
    %1580 = vmatpush1.msra.mxu0 0.0
    %1581 = vmatprep.subr.mxu0 0.0
    %1582 = vmatpush1.msra.mxu0 0.0
    %1583 = vmatprep.subr.mxu0 0.0
    %1584 = vmatpush1.msra.mxu0 0.0
    %1585 = vmatprep.subr.mxu0 0.0
    %1586 = vmatpush1.msra.mxu0 0.0
    %1587 = vmatprep.subr.mxu0 0.0
    %1588 = vmatpush1.msra.mxu0 0.0
    %1589 = vmatprep.subr.mxu0 0.0
    %1590 = vmatpush1.msra.mxu0 0.0
    %1591 = vmatprep.subr.mxu0 0.0
    %1592 = vmatpush1.msra.mxu0 0.0
    %1593 = vmatprep.subr.mxu0 0.0
    %1594 = vmatpush1.msra.mxu0 0.0
    %1595 = vmatprep.subr.mxu0 0.0
    %1596 = vmatpush1.msra.mxu0 0.0
    %1597 = vmatprep.subr.mxu0 0.0
    %1598 = vmatpush1.msra.mxu0 0.0
    %1599 = vmatprep.subr.mxu0 0.0
    %1600 = vmatpush1.msra.mxu0 0.0
    %1601 = vmatprep.subr.mxu0 0.0
    %1602 = vmatpush1.msra.mxu0 0.0
    %1603 = vmatprep.subr.mxu0 0.0
    %1604 = vmatpush1.msra.mxu0 0.0
    %1605 = vmatprep.subr.mxu0 0.0
    %1606 = vmatpush1.msra.mxu0 0.0
    %1607 = vmatprep.subr.mxu0 0.0
    %1608 = vmatpush1.msra.mxu0 0.0
    %1609 = vmatprep.subr.mxu0 0.0
    %1610 = vmatpush1.msra.mxu0 0.0
    %1611 = vmatprep.subr.mxu0 0.0
    %1612 = vmatpush1.msra.mxu0 0.0
    %1613 = vmatprep.subr.mxu0 0.0
    %1614 = vmatpush1.msra.mxu0 0.0
    %1615 = vmatprep.subr.mxu0 0.0
    %1616 = vmatpush1.msra.mxu0 0.0
    %1617 = vmatprep.mubr.f32.mxu0 0.0
    %v1618 = vand.u32 %v1176, 4294901760
    %1619 = vmatmul.mubr.f32.gmra.mrb[0].mxu0 %v1618
    %v1620 = vpop.f32.mrb[0].mxu0
    %v1621 = vadd.f32 %v1549, %v1620
    %v1622 = vpop.f32.mrb[0].mxu0
    %1623 = vdwg.mxu0
    %v1624 = vsel %vm1175, %v1174, 0
    %1626 = vmatprep.subr.mxu0 0.0
    %v1627 = vand.u32 %v1112, 4294901760
    %1628 = vmatpush1.msra.mxu0 %v1627
    %1629 = vmatprep.subr.mxu0 0.0
    %1630 = vmatpush1.msra.mxu0 0.0
    %1631 = vmatprep.subr.mxu0 0.0
    %1632 = vmatpush1.msra.mxu0 0.0
    %1633 = vmatprep.subr.mxu0 0.0
    %1634 = vmatpush1.msra.mxu0 0.0
    %1635 = vmatprep.subr.mxu0 0.0
    %1636 = vmatpush1.msra.mxu0 0.0
    %1637 = vmatprep.subr.mxu0 0.0
    %1638 = vmatpush1.msra.mxu0 0.0
    %1639 = vmatprep.subr.mxu0 0.0
    %1640 = vmatpush1.msra.mxu0 0.0
    %1641 = vmatprep.subr.mxu0 0.0
    %1642 = vmatpush1.msra.mxu0 0.0
    %1643 = vmatprep.subr.mxu0 0.0
    %1644 = vmatpush1.msra.mxu0 0.0
    %1645 = vmatprep.subr.mxu0 0.0
    %1646 = vmatpush1.msra.mxu0 0.0
    %1647 = vmatprep.subr.mxu0 0.0
    %1648 = vmatpush1.msra.mxu0 0.0
    %1649 = vmatprep.subr.mxu0 0.0
    %1650 = vmatpush1.msra.mxu0 0.0
    %1651 = vmatprep.subr.mxu0 0.0
    %1652 = vmatpush1.msra.mxu0 0.0
    %1653 = vmatprep.subr.mxu0 0.0
    %1654 = vmatpush1.msra.mxu0 0.0
    %1655 = vmatprep.subr.mxu0 0.0
    %1656 = vmatpush1.msra.mxu0 0.0
    %1657 = vmatprep.subr.mxu0 0.0
    %1658 = vmatpush1.msra.mxu0 0.0
    %1659 = vmatprep.subr.mxu0 0.0
    %1660 = vmatpush1.msra.mxu0 0.0
    %1661 = vmatprep.subr.mxu0 0.0
    %1662 = vmatpush1.msra.mxu0 0.0
    %1663 = vmatprep.subr.mxu0 0.0
    %1664 = vmatpush1.msra.mxu0 0.0
    %1665 = vmatprep.subr.mxu0 0.0
    %1666 = vmatpush1.msra.mxu0 0.0
    %1667 = vmatprep.subr.mxu0 0.0
    %1668 = vmatpush1.msra.mxu0 0.0
    %1669 = vmatprep.subr.mxu0 0.0
    %1670 = vmatpush1.msra.mxu0 0.0
    %1671 = vmatprep.subr.mxu0 0.0
    %1672 = vmatpush1.msra.mxu0 0.0
    %1673 = vmatprep.subr.mxu0 0.0
    %1674 = vmatpush1.msra.mxu0 0.0
    %1675 = vmatprep.subr.mxu0 0.0
    %1676 = vmatpush1.msra.mxu0 0.0
    %1677 = vmatprep.subr.mxu0 0.0
    %1678 = vmatpush1.msra.mxu0 0.0
    %1679 = vmatprep.subr.mxu0 0.0
    %1680 = vmatpush1.msra.mxu0 0.0
    %1681 = vmatprep.subr.mxu0 0.0
    %1682 = vmatpush1.msra.mxu0 0.0
    %1683 = vmatprep.subr.mxu0 0.0
    %1684 = vmatpush1.msra.mxu0 0.0
    %1685 = vmatprep.subr.mxu0 0.0
    %1686 = vmatpush1.msra.mxu0 0.0
    %1687 = vmatprep.subr.mxu0 0.0
    %1688 = vmatpush1.msra.mxu0 0.0
    %1689 = vmatprep.subr.mxu0 0.0
    %1690 = vmatpush1.msra.mxu0 0.0
    %1691 = vmatprep.mubr.f32.mxu0 0.0
    %v1692 = vand.u32 %v1624, 4294901760
    %v1693 = vsub.f32 %v1624, %v1692
    %v1694 = vand.u32 %v1693, 4294901760
    %v1695 = vsub.f32 %v1693, %v1694
    %v1696 = vand.u32 %v1695, 4294901760
    %1697 = vmatmul.mubr.f32.gmra.mrb[0].mxu0 %v1696
    %v1698 = vpop.f32.mrb[0].mxu0
    %v1699 = vadd.f32 0.0, %v1698
    %v1700 = vpop.f32.mrb[0].mxu0
    %1701 = vdwg.mxu0
    %1702 = vmatprep.subr.mxu0 0.0
    %v1703 = vand.u32 %v1112, 4294901760
    %v1704 = vsub.f32 %v1112, %v1703
    %v1705 = vand.u32 %v1704, 4294901760
    %v1706 = vsub.f32 %v1704, %v1705
    %v1707 = vand.u32 %v1706, 4294901760
    %1708 = vmatpush1.msra.mxu0 %v1707
    %1709 = vmatprep.subr.mxu0 0.0
    %1710 = vmatpush1.msra.mxu0 0.0
    %1711 = vmatprep.subr.mxu0 0.0
    %1712 = vmatpush1.msra.mxu0 0.0
    %1713 = vmatprep.subr.mxu0 0.0
    %1714 = vmatpush1.msra.mxu0 0.0
    %1715 = vmatprep.subr.mxu0 0.0
    %1716 = vmatpush1.msra.mxu0 0.0
    %1717 = vmatprep.subr.mxu0 0.0
    %1718 = vmatpush1.msra.mxu0 0.0
    %1719 = vmatprep.subr.mxu0 0.0
    %1720 = vmatpush1.msra.mxu0 0.0
    %1721 = vmatprep.subr.mxu0 0.0
    %1722 = vmatpush1.msra.mxu0 0.0
    %1723 = vmatprep.subr.mxu0 0.0
    %1724 = vmatpush1.msra.mxu0 0.0
    %1725 = vmatprep.subr.mxu0 0.0
    %1726 = vmatpush1.msra.mxu0 0.0
    %1727 = vmatprep.subr.mxu0 0.0
    %1728 = vmatpush1.msra.mxu0 0.0
    %1729 = vmatprep.subr.mxu0 0.0
    %1730 = vmatpush1.msra.mxu0 0.0
    %1731 = vmatprep.subr.mxu0 0.0
    %1732 = vmatpush1.msra.mxu0 0.0
    %1733 = vmatprep.subr.mxu0 0.0
    %1734 = vmatpush1.msra.mxu0 0.0
    %1735 = vmatprep.subr.mxu0 0.0
    %1736 = vmatpush1.msra.mxu0 0.0
    %1737 = vmatprep.subr.mxu0 0.0
    %1738 = vmatpush1.msra.mxu0 0.0
    %1739 = vmatprep.subr.mxu0 0.0
    %1740 = vmatpush1.msra.mxu0 0.0
    %1741 = vmatprep.subr.mxu0 0.0
    %1742 = vmatpush1.msra.mxu0 0.0
    %1743 = vmatprep.subr.mxu0 0.0
    %1744 = vmatpush1.msra.mxu0 0.0
    %1745 = vmatprep.subr.mxu0 0.0
    %1746 = vmatpush1.msra.mxu0 0.0
    %1747 = vmatprep.subr.mxu0 0.0
    %1748 = vmatpush1.msra.mxu0 0.0
    %1749 = vmatprep.subr.mxu0 0.0
    %1750 = vmatpush1.msra.mxu0 0.0
    %1751 = vmatprep.subr.mxu0 0.0
    %1752 = vmatpush1.msra.mxu0 0.0
    %1753 = vmatprep.subr.mxu0 0.0
    %1754 = vmatpush1.msra.mxu0 0.0
    %1755 = vmatprep.subr.mxu0 0.0
    %1756 = vmatpush1.msra.mxu0 0.0
    %1757 = vmatprep.subr.mxu0 0.0
    %1758 = vmatpush1.msra.mxu0 0.0
    %1759 = vmatprep.subr.mxu0 0.0
    %1760 = vmatpush1.msra.mxu0 0.0
    %1761 = vmatprep.subr.mxu0 0.0
    %1762 = vmatpush1.msra.mxu0 0.0
    %1763 = vmatprep.subr.mxu0 0.0
    %1764 = vmatpush1.msra.mxu0 0.0
    %1765 = vmatprep.subr.mxu0 0.0
    %1766 = vmatpush1.msra.mxu0 0.0
    %1767 = vmatprep.subr.mxu0 0.0
    %1768 = vmatpush1.msra.mxu0 0.0
    %1769 = vmatprep.subr.mxu0 0.0
    %1770 = vmatpush1.msra.mxu0 0.0
    %1771 = vmatprep.mubr.f32.mxu0 0.0
    %v1772 = vand.u32 %v1624, 4294901760
    %1773 = vmatmul.mubr.f32.gmra.mrb[0].mxu0 %v1772
    %v1774 = vpop.f32.mrb[0].mxu0
    %v1775 = vadd.f32 %v1699, %v1774
    %v1776 = vpop.f32.mrb[0].mxu0
    %1777 = vdwg.mxu0
    %1778 = vmatprep.subr.mxu0 0.0
    %v1779 = vand.u32 %v1112, 4294901760
    %v1780 = vsub.f32 %v1112, %v1779
    %1781 = vmatpush1.msra.mxu0 %v1780
    %1782 = vmatprep.subr.mxu0 0.0
    %1783 = vmatpush1.msra.mxu0 0.0
    %1784 = vmatprep.subr.mxu0 0.0
    %1785 = vmatpush1.msra.mxu0 0.0
    %1786 = vmatprep.subr.mxu0 0.0
    %1787 = vmatpush1.msra.mxu0 0.0
    %1788 = vmatprep.subr.mxu0 0.0
    %1789 = vmatpush1.msra.mxu0 0.0
    %1790 = vmatprep.subr.mxu0 0.0
    %1791 = vmatpush1.msra.mxu0 0.0
    %1792 = vmatprep.subr.mxu0 0.0
    %1793 = vmatpush1.msra.mxu0 0.0
    %1794 = vmatprep.subr.mxu0 0.0
    %1795 = vmatpush1.msra.mxu0 0.0
    %1796 = vmatprep.subr.mxu0 0.0
    %1797 = vmatpush1.msra.mxu0 0.0
    %1798 = vmatprep.subr.mxu0 0.0
    %1799 = vmatpush1.msra.mxu0 0.0
    %1800 = vmatprep.subr.mxu0 0.0
    %1801 = vmatpush1.msra.mxu0 0.0
    %1802 = vmatprep.subr.mxu0 0.0
    %1803 = vmatpush1.msra.mxu0 0.0
    %1804 = vmatprep.subr.mxu0 0.0
    %1805 = vmatpush1.msra.mxu0 0.0
    %1806 = vmatprep.subr.mxu0 0.0
    %1807 = vmatpush1.msra.mxu0 0.0
    %1808 = vmatprep.subr.mxu0 0.0
    %1809 = vmatpush1.msra.mxu0 0.0
    %1810 = vmatprep.subr.mxu0 0.0
    %1811 = vmatpush1.msra.mxu0 0.0
    %1812 = vmatprep.subr.mxu0 0.0
    %1813 = vmatpush1.msra.mxu0 0.0
    %1814 = vmatprep.subr.mxu0 0.0
    %1815 = vmatpush1.msra.mxu0 0.0
    %1816 = vmatprep.subr.mxu0 0.0
    %1817 = vmatpush1.msra.mxu0 0.0
    %1818 = vmatprep.subr.mxu0 0.0
    %1819 = vmatpush1.msra.mxu0 0.0
    %1820 = vmatprep.subr.mxu0 0.0
    %1821 = vmatpush1.msra.mxu0 0.0
    %1822 = vmatprep.subr.mxu0 0.0
    %1823 = vmatpush1.msra.mxu0 0.0
    %1824 = vmatprep.subr.mxu0 0.0
    %1825 = vmatpush1.msra.mxu0 0.0
    %1826 = vmatprep.subr.mxu0 0.0
    %1827 = vmatpush1.msra.mxu0 0.0
    %1828 = vmatprep.subr.mxu0 0.0
    %1829 = vmatpush1.msra.mxu0 0.0
    %1830 = vmatprep.subr.mxu0 0.0
    %1831 = vmatpush1.msra.mxu0 0.0
    %1832 = vmatprep.subr.mxu0 0.0
    %1833 = vmatpush1.msra.mxu0 0.0
    %1834 = vmatprep.subr.mxu0 0.0
    %1835 = vmatpush1.msra.mxu0 0.0
    %1836 = vmatprep.subr.mxu0 0.0
    %1837 = vmatpush1.msra.mxu0 0.0
    %1838 = vmatprep.subr.mxu0 0.0
    %1839 = vmatpush1.msra.mxu0 0.0
    %1840 = vmatprep.subr.mxu0 0.0
    %1841 = vmatpush1.msra.mxu0 0.0
    %1842 = vmatprep.subr.mxu0 0.0
    %1843 = vmatpush1.msra.mxu0 0.0
    %1844 = vmatprep.mubr.f32.mxu0 0.0
    %v1845 = vand.u32 %v1624, 4294901760
    %v1846 = vsub.f32 %v1624, %v1845
    %1847 = vmatmul.mubr.f32.gmra.mrb[0].mxu0 %v1846
    %v1848 = vpop.f32.mrb[0].mxu0
    %v1849 = vadd.f32 %v1775, %v1848
    %v1850 = vpop.f32.mrb[0].mxu0
    %1851 = vdwg.mxu0
    %1852 = vmatprep.subr.mxu0 0.0
    %v1853 = vand.u32 %v1112, 4294901760
    %1854 = vmatpush1.msra.mxu0 %v1853
    %1855 = vmatprep.subr.mxu0 0.0
    %1856 = vmatpush1.msra.mxu0 0.0
    %1857 = vmatprep.subr.mxu0 0.0
    %1858 = vmatpush1.msra.mxu0 0.0
    %1859 = vmatprep.subr.mxu0 0.0
    %1860 = vmatpush1.msra.mxu0 0.0
    %1861 = vmatprep.subr.mxu0 0.0
    %1862 = vmatpush1.msra.mxu0 0.0
    %1863 = vmatprep.subr.mxu0 0.0
    %1864 = vmatpush1.msra.mxu0 0.0
    %1865 = vmatprep.subr.mxu0 0.0
    %1866 = vmatpush1.msra.mxu0 0.0
    %1867 = vmatprep.subr.mxu0 0.0
    %1868 = vmatpush1.msra.mxu0 0.0
    %1869 = vmatprep.subr.mxu0 0.0
    %1870 = vmatpush1.msra.mxu0 0.0
    %1871 = vmatprep.subr.mxu0 0.0
    %1872 = vmatpush1.msra.mxu0 0.0
    %1873 = vmatprep.subr.mxu0 0.0
    %1874 = vmatpush1.msra.mxu0 0.0
    %1875 = vmatprep.subr.mxu0 0.0
    %1876 = vmatpush1.msra.mxu0 0.0
    %1877 = vmatprep.subr.mxu0 0.0
    %1878 = vmatpush1.msra.mxu0 0.0
    %1879 = vmatprep.subr.mxu0 0.0
    %1880 = vmatpush1.msra.mxu0 0.0
    %1881 = vmatprep.subr.mxu0 0.0
    %1882 = vmatpush1.msra.mxu0 0.0
    %1883 = vmatprep.subr.mxu0 0.0
    %1884 = vmatpush1.msra.mxu0 0.0
    %1885 = vmatprep.subr.mxu0 0.0
    %1886 = vmatpush1.msra.mxu0 0.0
    %1887 = vmatprep.subr.mxu0 0.0
    %1888 = vmatpush1.msra.mxu0 0.0
    %1889 = vmatprep.subr.mxu0 0.0
    %1890 = vmatpush1.msra.mxu0 0.0
    %1891 = vmatprep.subr.mxu0 0.0
    %1892 = vmatpush1.msra.mxu0 0.0
    %1893 = vmatprep.subr.mxu0 0.0
    %1894 = vmatpush1.msra.mxu0 0.0
    %1895 = vmatprep.subr.mxu0 0.0
    %1896 = vmatpush1.msra.mxu0 0.0
    %1897 = vmatprep.subr.mxu0 0.0
    %1898 = vmatpush1.msra.mxu0 0.0
    %1899 = vmatprep.subr.mxu0 0.0
    %1900 = vmatpush1.msra.mxu0 0.0
    %1901 = vmatprep.subr.mxu0 0.0
    %1902 = vmatpush1.msra.mxu0 0.0
    %1903 = vmatprep.subr.mxu0 0.0
    %1904 = vmatpush1.msra.mxu0 0.0
    %1905 = vmatprep.subr.mxu0 0.0
    %1906 = vmatpush1.msra.mxu0 0.0
    %1907 = vmatprep.subr.mxu0 0.0
    %1908 = vmatpush1.msra.mxu0 0.0
    %1909 = vmatprep.subr.mxu0 0.0
    %1910 = vmatpush1.msra.mxu0 0.0
    %1911 = vmatprep.subr.mxu0 0.0
    %1912 = vmatpush1.msra.mxu0 0.0
    %1913 = vmatprep.subr.mxu0 0.0
    %1914 = vmatpush1.msra.mxu0 0.0
    %1915 = vmatprep.subr.mxu0 0.0
    %1916 = vmatpush1.msra.mxu0 0.0
    %1917 = vmatprep.mubr.f32.mxu0 0.0
    %v1918 = vand.u32 %v1624, 4294901760
    %v1919 = vsub.f32 %v1624, %v1918
    %v1920 = vand.u32 %v1919, 4294901760
    %1921 = vmatmul.mubr.f32.gmra.mrb[0].mxu0 %v1920
    %v1922 = vpop.f32.mrb[0].mxu0
    %v1923 = vadd.f32 %v1849, %v1922
    %v1924 = vpop.f32.mrb[0].mxu0
    %1925 = vdwg.mxu0
    %1926 = vmatprep.subr.mxu0 0.0
    %v1927 = vand.u32 %v1112, 4294901760
    %v1928 = vsub.f32 %v1112, %v1927
    %v1929 = vand.u32 %v1928, 4294901760
    %1930 = vmatpush1.msra.mxu0 %v1929
    %1931 = vmatprep.subr.mxu0 0.0
    %1932 = vmatpush1.msra.mxu0 0.0
    %1933 = vmatprep.subr.mxu0 0.0
    %1934 = vmatpush1.msra.mxu0 0.0
    %1935 = vmatprep.subr.mxu0 0.0
    %1936 = vmatpush1.msra.mxu0 0.0
    %1937 = vmatprep.subr.mxu0 0.0
    %1938 = vmatpush1.msra.mxu0 0.0
    %1939 = vmatprep.subr.mxu0 0.0
    %1940 = vmatpush1.msra.mxu0 0.0
    %1941 = vmatprep.subr.mxu0 0.0
    %1942 = vmatpush1.msra.mxu0 0.0
    %1943 = vmatprep.subr.mxu0 0.0
    %1944 = vmatpush1.msra.mxu0 0.0
    %1945 = vmatprep.subr.mxu0 0.0
    %1946 = vmatpush1.msra.mxu0 0.0
    %1947 = vmatprep.subr.mxu0 0.0
    %1948 = vmatpush1.msra.mxu0 0.0
    %1949 = vmatprep.subr.mxu0 0.0
    %1950 = vmatpush1.msra.mxu0 0.0
    %1951 = vmatprep.subr.mxu0 0.0
    %1952 = vmatpush1.msra.mxu0 0.0
    %1953 = vmatprep.subr.mxu0 0.0
    %1954 = vmatpush1.msra.mxu0 0.0
    %1955 = vmatprep.subr.mxu0 0.0
    %1956 = vmatpush1.msra.mxu0 0.0
    %1957 = vmatprep.subr.mxu0 0.0
    %1958 = vmatpush1.msra.mxu0 0.0
    %1959 = vmatprep.subr.mxu0 0.0
    %1960 = vmatpush1.msra.mxu0 0.0
    %1961 = vmatprep.subr.mxu0 0.0
    %1962 = vmatpush1.msra.mxu0 0.0
    %1963 = vmatprep.subr.mxu0 0.0
    %1964 = vmatpush1.msra.mxu0 0.0
    %1965 = vmatprep.subr.mxu0 0.0
    %1966 = vmatpush1.msra.mxu0 0.0
    %1967 = vmatprep.subr.mxu0 0.0
    %1968 = vmatpush1.msra.mxu0 0.0
    %1969 = vmatprep.subr.mxu0 0.0
    %1970 = vmatpush1.msra.mxu0 0.0
    %1971 = vmatprep.subr.mxu0 0.0
    %1972 = vmatpush1.msra.mxu0 0.0
    %1973 = vmatprep.subr.mxu0 0.0
    %1974 = vmatpush1.msra.mxu0 0.0
    %1975 = vmatprep.subr.mxu0 0.0
    %1976 = vmatpush1.msra.mxu0 0.0
    %1977 = vmatprep.subr.mxu0 0.0
    %1978 = vmatpush1.msra.mxu0 0.0
    %1979 = vmatprep.subr.mxu0 0.0
    %1980 = vmatpush1.msra.mxu0 0.0
    %1981 = vmatprep.subr.mxu0 0.0
    %1982 = vmatpush1.msra.mxu0 0.0
    %1983 = vmatprep.subr.mxu0 0.0
    %1984 = vmatpush1.msra.mxu0 0.0
    %1985 = vmatprep.subr.mxu0 0.0
    %1986 = vmatpush1.msra.mxu0 0.0
    %1987 = vmatprep.subr.mxu0 0.0
    %1988 = vmatpush1.msra.mxu0 0.0
    %1989 = vmatprep.subr.mxu0 0.0
    %1990 = vmatpush1.msra.mxu0 0.0
    %1991 = vmatprep.subr.mxu0 0.0
    %1992 = vmatpush1.msra.mxu0 0.0
    %1993 = vmatprep.mubr.f32.mxu0 0.0
    %v1994 = vand.u32 %v1624, 4294901760
    %1995 = vmatmul.mubr.f32.gmra.mrb[0].mxu0 %v1994
    %v1996 = vpop.f32.mrb[0].mxu0
    %v1997 = vadd.f32 %v1923, %v1996
    %v1998 = vpop.f32.mrb[0].mxu0
    %1999 = vdwg.mxu0
    %2000 = vmatprep.subr.mxu0 0.0
    %v2001 = vand.u32 %v1112, 4294901760
    %2002 = vmatpush1.msra.mxu0 %v2001
    %2003 = vmatprep.subr.mxu0 0.0
    %2004 = vmatpush1.msra.mxu0 0.0
    %2005 = vmatprep.subr.mxu0 0.0
    %2006 = vmatpush1.msra.mxu0 0.0
    %2007 = vmatprep.subr.mxu0 0.0
    %2008 = vmatpush1.msra.mxu0 0.0
    %2009 = vmatprep.subr.mxu0 0.0
    %2010 = vmatpush1.msra.mxu0 0.0
    %2011 = vmatprep.subr.mxu0 0.0
    %2012 = vmatpush1.msra.mxu0 0.0
    %2013 = vmatprep.subr.mxu0 0.0
    %2014 = vmatpush1.msra.mxu0 0.0
    %2015 = vmatprep.subr.mxu0 0.0
    %2016 = vmatpush1.msra.mxu0 0.0
    %2017 = vmatprep.subr.mxu0 0.0
    %2018 = vmatpush1.msra.mxu0 0.0
    %2019 = vmatprep.subr.mxu0 0.0
    %2020 = vmatpush1.msra.mxu0 0.0
    %2021 = vmatprep.subr.mxu0 0.0
    %2022 = vmatpush1.msra.mxu0 0.0
    %2023 = vmatprep.subr.mxu0 0.0
    %2024 = vmatpush1.msra.mxu0 0.0
    %2025 = vmatprep.subr.mxu0 0.0
    %2026 = vmatpush1.msra.mxu0 0.0
    %2027 = vmatprep.subr.mxu0 0.0
    %2028 = vmatpush1.msra.mxu0 0.0
    %2029 = vmatprep.subr.mxu0 0.0
    %2030 = vmatpush1.msra.mxu0 0.0
    %2031 = vmatprep.subr.mxu0 0.0
    %2032 = vmatpush1.msra.mxu0 0.0
    %2033 = vmatprep.subr.mxu0 0.0
    %2034 = vmatpush1.msra.mxu0 0.0
    %2035 = vmatprep.subr.mxu0 0.0
    %2036 = vmatpush1.msra.mxu0 0.0
    %2037 = vmatprep.subr.mxu0 0.0
    %2038 = vmatpush1.msra.mxu0 0.0
    %2039 = vmatprep.subr.mxu0 0.0
    %2040 = vmatpush1.msra.mxu0 0.0
    %2041 = vmatprep.subr.mxu0 0.0
    %2042 = vmatpush1.msra.mxu0 0.0
    %2043 = vmatprep.subr.mxu0 0.0
    %2044 = vmatpush1.msra.mxu0 0.0
    %2045 = vmatprep.subr.mxu0 0.0
    %2046 = vmatpush1.msra.mxu0 0.0
    %2047 = vmatprep.subr.mxu0 0.0
    %2048 = vmatpush1.msra.mxu0 0.0
    %2049 = vmatprep.subr.mxu0 0.0
    %2050 = vmatpush1.msra.mxu0 0.0
    %2051 = vmatprep.subr.mxu0 0.0
    %2052 = vmatpush1.msra.mxu0 0.0
    %2053 = vmatprep.subr.mxu0 0.0
    %2054 = vmatpush1.msra.mxu0 0.0
    %2055 = vmatprep.subr.mxu0 0.0
    %2056 = vmatpush1.msra.mxu0 0.0
    %2057 = vmatprep.subr.mxu0 0.0
    %2058 = vmatpush1.msra.mxu0 0.0
    %2059 = vmatprep.subr.mxu0 0.0
    %2060 = vmatpush1.msra.mxu0 0.0
    %2061 = vmatprep.subr.mxu0 0.0
    %2062 = vmatpush1.msra.mxu0 0.0
    %2063 = vmatprep.subr.mxu0 0.0
    %2064 = vmatpush1.msra.mxu0 0.0
    %2065 = vmatprep.mubr.f32.mxu0 0.0
    %v2066 = vand.u32 %v1624, 4294901760
    %2067 = vmatmul.mubr.f32.gmra.mrb[0].mxu0 %v2066
    %v2068 = vpop.f32.mrb[0].mxu0
    %v2069 = vadd.f32 %v1997, %v2068
    %v2070 = vpop.f32.mrb[0].mxu0
    %2071 = vdwg.mxu0
    %v2074 = vrot.slane %v2069, 7
    %v2075 = vsel %vm1135, %v2074, %v1621
    %2077 = vst [vmem:[#allocation5] sm:$0x3] %v2075
    // Predicated region
    $region22: #{tpu_custom_call.1} parent=1 // pred_check
      _
    $region23: #{tpu_custom_call.1} parent=1 // pred_check_branch
      %2079 = sbr.rel (0) target = $region25
    $region24: #{tpu_custom_call.1} parent=1 // pred_region
      %s2081 = ssub.s32 32, 32
      %2082 = vsyncadd [#allocation4], %s2081
      %s2084 = sshll.u32 [#allocation5], 4
      %s2085 = int_to_ptr.vmem [resolvable:$true] %s2084
      %2087 = dma.vmem_to_hbm [thread:$0]  %s2085, 32, %s4, [#allocation4]
    $region25: #{tpu_custom_call.1} parent=1 // pred_fallthru
      _
    // Predicated region
    $region26: #{tpu_custom_call.1} parent=1 // pred_check
      _
    $region27: #{tpu_custom_call.1} parent=1 // pred_check_branch
      %2089 = sbr.rel (0) target = $region29
    $region28: #{tpu_custom_call.1} parent=1 // pred_region
      %s2091 = ssub.s32 32, 32
      %2092 = vsyncadd [#allocation7], %s2091
      %s2094 = sshll.u32 [#allocation6], 4
      %s2095 = int_to_ptr.vmem [resolvable:$true] %s2094
      %2097 = dma.vmem_to_hbm [thread:$0]  %s2095, 32, %s5, [#allocation7]
    $region29: #{tpu_custom_call.1} parent=1 // pred_fallthru
      _
    // Predicated region
    $region30: #{tpu_custom_call.1} parent=1 // pred_check
      _
    $region31: #{tpu_custom_call.1} parent=1 // pred_check_branch
      %2099 = sbr.rel (0) target = $region33
    $region32: #{tpu_custom_call.1} parent=1 // pred_region
      %2100 = dma.done [#allocation4], 32
    $region33: #{tpu_custom_call.1} parent=1 // pred_fallthru
      _
    // Predicated region
    $region34: #{tpu_custom_call.1} parent=1 // pred_check
      _
    $region35: #{tpu_custom_call.1} parent=1 // pred_check_branch
      %2102 = sbr.rel (0) target = $region37
    $region36: #{tpu_custom_call.1} parent=1 // pred_region
      %2103 = dma.done [#allocation7], 32
    $region37: #{tpu_custom_call.1} parent=1 // pred_fallthru
      _
    %2104 = vsyncpa [#allocation3], 1
    %2105 = vsyncpa [#allocation4], 1
    %2106 = vsyncpa [#allocation7], 1

</llo_original>
